<compile_context>
chip_gen: v7x
topology: tpu7x:2x2x1
jax: 0.10.0
libtpu: 0.0.40
codegen_flags: <defaults>
</compile_context>

<pallas_src>
import jax
import jax.numpy as jnp
from jax.experimental import pallas as pl
from jax.experimental.pallas import tpu as pltpu

BN_EPS = 1e-5
H1 = 1024        # fc1 output width
H2 = 512         # fc2 output width
OUT_TRUE = 125   # real fc3 output width
OUT_PAD = 128    # lane-dense padded width used inside the kernel


def _mlp_kernel(x_ref,
                w1_ref, gb1_ref,
                w2_hbm, gb2_ref,
                w3_hbm, gb3_ref,
                alpha_ref,
                out_ref,
                w2_vmem, w3_vmem, dma_sem):
    """fc (no bias) -> BatchNorm (batch stats, single pass) -> PReLU, three times."""

    # Kick off the big layer-2/3 weight fetches immediately; they overlap layer-1 compute.
    w2_cp = pltpu.make_async_copy(w2_hbm, w2_vmem, dma_sem.at[0])
    w3_cp = pltpu.make_async_copy(w3_hbm, w3_vmem, dma_sem.at[1])
    w2_cp.start()
    w3_cp.start()

    def layer(h, w_bf16, gb_ref, alpha):
        # bf16 x bf16 -> f32 on the MXU; only the small activation operand is cast.
        y = jnp.dot(h.astype(jnp.bfloat16), w_bf16,
                    preferred_element_type=jnp.float32)
        # Single-pass batch statistics: E[y], E[y^2] -> biased variance (guarded >= 0).
        mean = jnp.mean(y, axis=0, keepdims=True)
        var = jnp.maximum(jnp.mean(y * y, axis=0, keepdims=True) - mean * mean, 0.0)
        gamma = gb_ref[0:1, :]
        beta = gb_ref[1:2, :]
        # Fold gamma into the normalization scale; rsqrt goes to the EUP slot.
        scale = gamma * jax.lax.rsqrt(var + BN_EPS)
        y_bn = y * scale + (beta - mean * scale)
        # PReLU with a single shared parameter per layer (scalar from SMEM).
        return jnp.where(y_bn >= 0, y_bn, alpha * y_bn)

    h = layer(x_ref[...], w1_ref[...], gb1_ref, alpha_ref[0])
    w2_cp.wait()
    h = layer(h, w2_vmem[...], gb2_ref, alpha_ref[1])
    w3_cp.wait()
    h = layer(h, w3_vmem[...], gb3_ref, alpha_ref[2])
    out_ref[...] = h


def baseline_model1_forward(x, packed):
    """BaselineModel1 forward as a single Pallas kernel call. Returns [B, 125] float32."""
    B = x.shape[0]

    vmem = pl.BlockSpec(memory_space=pltpu.MemorySpace.VMEM)
    smem = pl.BlockSpec(memory_space=pltpu.MemorySpace.SMEM)
    hbm = pl.BlockSpec(memory_space=pl.ANY)   # raw ref; DMA'd manually inside the kernel

    out_padded = pl.pallas_call(
        _mlp_kernel,
        out_shape=jax.ShapeDtypeStruct((B, OUT_PAD), jnp.float32),
        in_specs=[vmem,          # x
                  vmem, vmem,    # w1 (tiny), gb1
                  hbm,  vmem,    # w2 (manual DMA), gb2
                  hbm,  vmem,    # w3 (manual DMA), gb3
                  smem],         # alphas
        out_specs=vmem,
        scratch_shapes=[
            pltpu.VMEM((H1, H2), jnp.bfloat16),        # w2 landing buffer
            pltpu.VMEM((H2, OUT_PAD), jnp.bfloat16),   # w3 landing buffer
            pltpu.SemaphoreType.DMA((2,)),
        ],
        compiler_params=pltpu.CompilerParams(vmem_limit_bytes=16 << 20),
    )(
        x,
        packed["w1"], packed["gb1"],
        packed["w2"], packed["gb2"],
        packed["w3"], packed["gb3"],
        packed["alphas"],
    )
    return out_padded[:, :OUT_TRUE]


def init_params(key, inputsize):
    """Parameters mirroring PyTorch defaults.

    Linear weights: uniform(+/- 1/sqrt(fan_in)), stored as [in, out] (transposed vs
    PyTorch's [out, in]).  Linear biases are intentionally NOT created: each linear is
    immediately followed by training-mode BatchNorm, whose mean subtraction cancels any
    per-feature bias exactly.  BatchNorm1d affine defaults: gamma=1, beta=0.
    PReLU default: 0.25 (one shared parameter per layer).
    """
    dims = [(inputsize, H1), (H1, H2), (H2, OUT_TRUE)]
    params = {}
    for idx, (fan_in, fan_out) in enumerate(dims, start=1):
        key, kw = jax.random.split(key)
        bound = 1.0 / jnp.sqrt(jnp.float32(fan_in))
        params[f"w{idx}"] = jax.random.uniform(
            kw, (fan_in, fan_out), jnp.float32, -bound, bound)
        params[f"g{idx}"] = jnp.ones((fan_out,), jnp.float32)
        params[f"be{idx}"] = jnp.zeros((fan_out,), jnp.float32)
    params["alphas"] = jnp.full((3,), 0.25, jnp.float32)
    return params


def pack_params(params):
    """One-time conversion to the kernel's streaming format.

    * weights -> bfloat16 (halves HBM traffic), layer-3 columns zero-padded 125 -> 128
    * gamma/beta stacked into one [2, F] f32 array per layer (fewer tiny DMAs)
    * PReLU alphas kept as a 1-D (3,) f32 SMEM array
    """
    packed = {}
    for i in (1, 2, 3):
        w = params[f"w{i}"]
        g = params[f"g{i}"]
        be = params[f"be{i}"]
        if i == 3:
            pad = OUT_PAD - OUT_TRUE
            w = jnp.pad(w, ((0, 0), (0, pad)))                # zero weight columns
            g = jnp.pad(g, (0, pad), constant_values=1.0)     # harmless pad values,
            be = jnp.pad(be, (0, pad), constant_values=0.0)   # sliced away later
        packed[f"w{i}"] = w.astype(jnp.bfloat16)
        packed[f"gb{i}"] = jnp.stack([g, be], axis=0)         # [2, F] f32
    packed["alphas"] = params["alphas"]
    return packed


def reference_forward(x, packed):
    """Pure-JAX reference of the exact same math (bf16 operands) for correctness checks."""
    h = x.astype(jnp.float32)
    for i in (1, 2, 3):
        w = packed[f"w{i}"]                      # bf16, [in, out]
        gamma = packed[f"gb{i}"][0:1, :]
        beta = packed[f"gb{i}"][1:2, :]
        y = jnp.dot(h.astype(jnp.bfloat16), w, preferred_element_type=jnp.float32)
        mean = jnp.mean(y, axis=0, keepdims=True)
        var = jnp.maximum(jnp.mean(y * y, axis=0, keepdims=True) - mean * mean, 0.0)
        scale = gamma * jax.lax.rsqrt(var + BN_EPS)
        y_bn = y * scale + (beta - mean * scale)
        a = packed["alphas"][i - 1]
        h = jnp.where(y_bn >= 0, y_bn, a * y_bn)
    return h[:, :OUT_TRUE]


if __name__ == "__main__":
    key = jax.random.PRNGKey(0)
    key, kx, kp = jax.random.split(key, 3)

    batch = 8        # whole batch resident in one block (BN stats span the batch)
    inputsize = 32   # small feature size consistent with nn.Linear(inputsize, 1024)

    x = jax.random.normal(kx, (batch, inputsize), jnp.float32)
    params = init_params(kp, inputsize)
    packed = pack_params(params)

    out = baseline_model1_forward(x, packed)
    out = jax.block_until_ready(out)

    ref = reference_forward(x, packed)
    assert out.shape == (batch, OUT_TRUE), out.shape
    assert jnp.allclose(out, ref, atol=2e-3, rtol=2e-3), "mismatch vs reference"

    print("KERNEL_OK")
</pallas_src>

<mosaic_0001>
module attributes {stable_mosaic.version = 11 : i64} {
  func.func @_mlp_kernel(%arg0: memref<8x32xf32, #tpu.memory_space<vmem>>, %arg1: memref<32x1024xbf16, #tpu.memory_space<vmem>>, %arg2: memref<2x1024xf32, #tpu.memory_space<vmem>>, %arg3: memref<1024x512xbf16, #tpu.memory_space<any>>, %arg4: memref<2x512xf32, #tpu.memory_space<vmem>>, %arg5: memref<512x128xbf16, #tpu.memory_space<any>>, %arg6: memref<2x128xf32, #tpu.memory_space<vmem>>, %arg7: memref<3xf32, #tpu.memory_space<smem>>, %arg8: memref<8x128xf32, #tpu.memory_space<vmem>>, %arg9: memref<1024x512xbf16, #tpu.memory_space<vmem>>, %arg10: memref<512x128xbf16, #tpu.memory_space<vmem>>, %arg11: memref<2x!tpu.dma_semaphore, #tpu.memory_space<semaphore_mem>>) attributes {dimension_semantics = [], scalar_prefetch = 0 : i64, scratch_operands = 3 : i64, tpu.core_type = #tpu.core_type<tc>} {
    %c0_i32 = arith.constant 0 : i32
    %0 = tpu.memref_slice %arg11[%c0_i32] : memref<2x!tpu.dma_semaphore, #tpu.memory_space<semaphore_mem>> -> memref<1x!tpu.dma_semaphore, #tpu.memory_space<semaphore_mem>>
    %1 = tpu.memref_squeeze %0 : memref<1x!tpu.dma_semaphore, #tpu.memory_space<semaphore_mem>> -> memref<!tpu.dma_semaphore, #tpu.memory_space<semaphore_mem>>
    tpu.enqueue_dma source(%arg3 : memref<1024x512xbf16, #tpu.memory_space<any>>) target(%arg9 : memref<1024x512xbf16, #tpu.memory_space<vmem>>) target_semaphore(%1 : memref<!tpu.dma_semaphore, #tpu.memory_space<semaphore_mem>>)
    %c1_i32 = arith.constant 1 : i32
    %2 = tpu.memref_slice %arg11[%c1_i32] : memref<2x!tpu.dma_semaphore, #tpu.memory_space<semaphore_mem>> -> memref<1x!tpu.dma_semaphore, #tpu.memory_space<semaphore_mem>>
    %3 = tpu.memref_squeeze %2 : memref<1x!tpu.dma_semaphore, #tpu.memory_space<semaphore_mem>> -> memref<!tpu.dma_semaphore, #tpu.memory_space<semaphore_mem>>
    tpu.enqueue_dma source(%arg5 : memref<512x128xbf16, #tpu.memory_space<any>>) target(%arg10 : memref<512x128xbf16, #tpu.memory_space<vmem>>) target_semaphore(%3 : memref<!tpu.dma_semaphore, #tpu.memory_space<semaphore_mem>>)
    %c0 = arith.constant 0 : index
    %c0_0 = arith.constant 0 : index
    %4 = vector.load %arg0[%c0, %c0_0] : memref<8x32xf32, #tpu.memory_space<vmem>>, vector<8x32xf32>
    %c0_1 = arith.constant 0 : index
    %c0_2 = arith.constant 0 : index
    %5 = vector.load %arg1[%c0_1, %c0_2] : memref<32x1024xbf16, #tpu.memory_space<vmem>>, vector<32x1024xbf16>
    %c0_3 = arith.constant 0 : index
    %6 = memref.load %arg7[%c0_3] : memref<3xf32, #tpu.memory_space<smem>>
    %7 = arith.truncf %4 : vector<8x32xf32> to vector<8x32xbf16>
    %cst = arith.constant dense<0.000000e+00> : vector<8x1024xf32>
    %8 = tpu.matmul %7, %5, %cst {dimension_numbers = #tpu.dot_dimension_numbers<[1], [0], [0], [1], [0, 0, 1, 1], [], []>} : vector<8x32xbf16>, vector<32x1024xbf16>, vector<8x1024xf32> -> vector<8x1024xf32>
    %cst_4 = arith.constant dense<0.000000e+00> : vector<1024xf32>
    %9 = vector.multi_reduction <add>, %8, %cst_4 [0] : vector<8x1024xf32> to vector<1024xf32>
    %10 = vector.shape_cast %9 : vector<1024xf32> to vector<1x1024xf32>
    %cst_5 = arith.constant 8.000000e+00 : f32
    %11 = vector.broadcast %cst_5 : f32 to vector<1x1024xf32>
    %12 = arith.divf %10, %11 : vector<1x1024xf32>
    %13 = arith.mulf %8, %8 : vector<8x1024xf32>
    %cst_6 = arith.constant dense<0.000000e+00> : vector<1024xf32>
    %14 = vector.multi_reduction <add>, %13, %cst_6 [0] : vector<8x1024xf32> to vector<1024xf32>
    %15 = vector.shape_cast %14 : vector<1024xf32> to vector<1x1024xf32>
    %cst_7 = arith.constant 8.000000e+00 : f32
    %16 = vector.broadcast %cst_7 : f32 to vector<1x1024xf32>
    %17 = arith.divf %15, %16 : vector<1x1024xf32>
    %18 = arith.mulf %12, %12 : vector<1x1024xf32>
    %19 = arith.subf %17, %18 : vector<1x1024xf32>
    %cst_8 = arith.constant 0.000000e+00 : f32
    %20 = vector.broadcast %cst_8 : f32 to vector<1x1024xf32>
    %21 = arith.maximumf %19, %20 : vector<1x1024xf32>
    %c0_9 = arith.constant 0 : index
    %c0_10 = arith.constant 0 : index
    %22 = vector.load %arg2[%c0_9, %c0_10] : memref<2x1024xf32, #tpu.memory_space<vmem>>, vector<1x1024xf32>
    %c1 = arith.constant 1 : index
    %c0_11 = arith.constant 0 : index
    %23 = vector.load %arg2[%c1, %c0_11] : memref<2x1024xf32, #tpu.memory_space<vmem>>, vector<1x1024xf32>
    %cst_12 = arith.constant 9.99999974E-6 : f32
    %24 = vector.broadcast %cst_12 : f32 to vector<1x1024xf32>
    %25 = arith.addf %21, %24 : vector<1x1024xf32>
    %26 = math.rsqrt %25 : vector<1x1024xf32>
    %27 = arith.mulf %22, %26 : vector<1x1024xf32>
    %28 = vector.broadcast %27 : vector<1x1024xf32> to vector<8x1024xf32>
    %29 = arith.mulf %8, %28 : vector<8x1024xf32>
    %30 = arith.mulf %12, %27 : vector<1x1024xf32>
    %31 = arith.subf %23, %30 : vector<1x1024xf32>
    %32 = vector.broadcast %31 : vector<1x1024xf32> to vector<8x1024xf32>
    %33 = arith.addf %29, %32 : vector<8x1024xf32>
    %cst_13 = arith.constant 0.000000e+00 : f32
    %34 = vector.broadcast %cst_13 : f32 to vector<8x1024xf32>
    %35 = arith.cmpf oge, %33, %34 : vector<8x1024xf32>
    %36 = vector.broadcast %6 : f32 to vector<8x1024xf32>
    %37 = arith.mulf %36, %33 : vector<8x1024xf32>
    %38 = arith.select %35, %33, %37 : vector<8x1024xi1>, vector<8x1024xf32>
    %c0_i32_14 = arith.constant 0 : i32
    %39 = tpu.memref_slice %arg11[%c0_i32_14] : memref<2x!tpu.dma_semaphore, #tpu.memory_space<semaphore_mem>> -> memref<1x!tpu.dma_semaphore, #tpu.memory_space<semaphore_mem>>
    %40 = tpu.memref_squeeze %39 : memref<1x!tpu.dma_semaphore, #tpu.memory_space<semaphore_mem>> -> memref<!tpu.dma_semaphore, #tpu.memory_space<semaphore_mem>>
    tpu.wait_dma2 semaphore(%40 : memref<!tpu.dma_semaphore, #tpu.memory_space<semaphore_mem>>) src(%arg3 : memref<1024x512xbf16, #tpu.memory_space<any>>) dst(%arg9 : memref<1024x512xbf16, #tpu.memory_space<vmem>>)
    %c0_15 = arith.constant 0 : index
    %c0_16 = arith.constant 0 : index
    %41 = vector.load %arg9[%c0_15, %c0_16] : memref<1024x512xbf16, #tpu.memory_space<vmem>>, vector<1024x512xbf16>
    %c1_17 = arith.constant 1 : index
    %42 = memref.load %arg7[%c1_17] : memref<3xf32, #tpu.memory_space<smem>>
    %43 = arith.truncf %38 : vector<8x1024xf32> to vector<8x1024xbf16>
    %cst_18 = arith.constant dense<0.000000e+00> : vector<8x512xf32>
    %44 = tpu.matmul %43, %41, %cst_18 {dimension_numbers = #tpu.dot_dimension_numbers<[1], [0], [0], [1], [0, 0, 1, 1], [], []>} : vector<8x1024xbf16>, vector<1024x512xbf16>, vector<8x512xf32> -> vector<8x512xf32>
    %cst_19 = arith.constant dense<0.000000e+00> : vector<512xf32>
    %45 = vector.multi_reduction <add>, %44, %cst_19 [0] : vector<8x512xf32> to vector<512xf32>
    %46 = vector.shape_cast %45 : vector<512xf32> to vector<1x512xf32>
    %cst_20 = arith.constant 8.000000e+00 : f32
    %47 = vector.broadcast %cst_20 : f32 to vector<1x512xf32>
    %48 = arith.divf %46, %47 : vector<1x512xf32>
    %49 = arith.mulf %44, %44 : vector<8x512xf32>
    %cst_21 = arith.constant dense<0.000000e+00> : vector<512xf32>
    %50 = vector.multi_reduction <add>, %49, %cst_21 [0] : vector<8x512xf32> to vector<512xf32>
    %51 = vector.shape_cast %50 : vector<512xf32> to vector<1x512xf32>
    %cst_22 = arith.constant 8.000000e+00 : f32
    %52 = vector.broadcast %cst_22 : f32 to vector<1x512xf32>
    %53 = arith.divf %51, %52 : vector<1x512xf32>
    %54 = arith.mulf %48, %48 : vector<1x512xf32>
    %55 = arith.subf %53, %54 : vector<1x512xf32>
    %cst_23 = arith.constant 0.000000e+00 : f32
    %56 = vector.broadcast %cst_23 : f32 to vector<1x512xf32>
    %57 = arith.maximumf %55, %56 : vector<1x512xf32>
    %c0_24 = arith.constant 0 : index
    %c0_25 = arith.constant 0 : index
    %58 = vector.load %arg4[%c0_24, %c0_25] : memref<2x512xf32, #tpu.memory_space<vmem>>, vector<1x512xf32>
    %c1_26 = arith.constant 1 : index
    %c0_27 = arith.constant 0 : index
    %59 = vector.load %arg4[%c1_26, %c0_27] : memref<2x512xf32, #tpu.memory_space<vmem>>, vector<1x512xf32>
    %cst_28 = arith.constant 9.99999974E-6 : f32
    %60 = vector.broadcast %cst_28 : f32 to vector<1x512xf32>
    %61 = arith.addf %57, %60 : vector<1x512xf32>
    %62 = math.rsqrt %61 : vector<1x512xf32>
    %63 = arith.mulf %58, %62 : vector<1x512xf32>
    %64 = vector.broadcast %63 : vector<1x512xf32> to vector<8x512xf32>
    %65 = arith.mulf %44, %64 : vector<8x512xf32>
    %66 = arith.mulf %48, %63 : vector<1x512xf32>
    %67 = arith.subf %59, %66 : vector<1x512xf32>
    %68 = vector.broadcast %67 : vector<1x512xf32> to vector<8x512xf32>
    %69 = arith.addf %65, %68 : vector<8x512xf32>
    %cst_29 = arith.constant 0.000000e+00 : f32
    %70 = vector.broadcast %cst_29 : f32 to vector<8x512xf32>
    %71 = arith.cmpf oge, %69, %70 : vector<8x512xf32>
    %72 = vector.broadcast %42 : f32 to vector<8x512xf32>
    %73 = arith.mulf %72, %69 : vector<8x512xf32>
    %74 = arith.select %71, %69, %73 : vector<8x512xi1>, vector<8x512xf32>
    %c1_i32_30 = arith.constant 1 : i32
    %75 = tpu.memref_slice %arg11[%c1_i32_30] : memref<2x!tpu.dma_semaphore, #tpu.memory_space<semaphore_mem>> -> memref<1x!tpu.dma_semaphore, #tpu.memory_space<semaphore_mem>>
    %76 = tpu.memref_squeeze %75 : memref<1x!tpu.dma_semaphore, #tpu.memory_space<semaphore_mem>> -> memref<!tpu.dma_semaphore, #tpu.memory_space<semaphore_mem>>
    tpu.wait_dma2 semaphore(%76 : memref<!tpu.dma_semaphore, #tpu.memory_space<semaphore_mem>>) src(%arg5 : memref<512x128xbf16, #tpu.memory_space<any>>) dst(%arg10 : memref<512x128xbf16, #tpu.memory_space<vmem>>)
    %c0_31 = arith.constant 0 : index
    %c0_32 = arith.constant 0 : index
    %77 = vector.load %arg10[%c0_31, %c0_32] : memref<512x128xbf16, #tpu.memory_space<vmem>>, vector<512x128xbf16>
    %c2 = arith.constant 2 : index
    %78 = memref.load %arg7[%c2] : memref<3xf32, #tpu.memory_space<smem>>
    %79 = arith.truncf %74 : vector<8x512xf32> to vector<8x512xbf16>
    %cst_33 = arith.constant dense<0.000000e+00> : vector<8x128xf32>
    %80 = tpu.matmul %79, %77, %cst_33 {dimension_numbers = #tpu.dot_dimension_numbers<[1], [0], [0], [1], [0, 0, 1, 1], [], []>} : vector<8x512xbf16>, vector<512x128xbf16>, vector<8x128xf32> -> vector<8x128xf32>
    %cst_34 = arith.constant dense<0.000000e+00> : vector<128xf32>
    %81 = vector.multi_reduction <add>, %80, %cst_34 [0] : vector<8x128xf32> to vector<128xf32>
    %82 = vector.shape_cast %81 : vector<128xf32> to vector<1x128xf32>
    %cst_35 = arith.constant 8.000000e+00 : f32
    %83 = vector.broadcast %cst_35 : f32 to vector<1x128xf32>
    %84 = arith.divf %82, %83 : vector<1x128xf32>
    %85 = arith.mulf %80, %80 : vector<8x128xf32>
    %cst_36 = arith.constant dense<0.000000e+00> : vector<128xf32>
    %86 = vector.multi_reduction <add>, %85, %cst_36 [0] : vector<8x128xf32> to vector<128xf32>
    %87 = vector.shape_cast %86 : vector<128xf32> to vector<1x128xf32>
    %cst_37 = arith.constant 8.000000e+00 : f32
    %88 = vector.broadcast %cst_37 : f32 to vector<1x128xf32>
    %89 = arith.divf %87, %88 : vector<1x128xf32>
    %90 = arith.mulf %84, %84 : vector<1x128xf32>
    %91 = arith.subf %89, %90 : vector<1x128xf32>
    %cst_38 = arith.constant 0.000000e+00 : f32
    %92 = vector.broadcast %cst_38 : f32 to vector<1x128xf32>
    %93 = arith.maximumf %91, %92 : vector<1x128xf32>
    %c0_39 = arith.constant 0 : index
    %c0_40 = arith.constant 0 : index
    %94 = vector.load %arg6[%c0_39, %c0_40] : memref<2x128xf32, #tpu.memory_space<vmem>>, vector<1x128xf32>
    %c1_41 = arith.constant 1 : index
    %c0_42 = arith.constant 0 : index
    %95 = vector.load %arg6[%c1_41, %c0_42] : memref<2x128xf32, #tpu.memory_space<vmem>>, vector<1x128xf32>
    %cst_43 = arith.constant 9.99999974E-6 : f32
    %96 = vector.broadcast %cst_43 : f32 to vector<1x128xf32>
    %97 = arith.addf %93, %96 : vector<1x128xf32>
    %98 = math.rsqrt %97 : vector<1x128xf32>
    %99 = arith.mulf %94, %98 : vector<1x128xf32>
    %100 = vector.broadcast %99 : vector<1x128xf32> to vector<8x128xf32>
    %101 = arith.mulf %80, %100 : vector<8x128xf32>
    %102 = arith.mulf %84, %99 : vector<1x128xf32>
    %103 = arith.subf %95, %102 : vector<1x128xf32>
    %104 = vector.broadcast %103 : vector<1x128xf32> to vector<8x128xf32>
    %105 = arith.addf %101, %104 : vector<8x128xf32>
    %cst_44 = arith.constant 0.000000e+00 : f32
    %106 = vector.broadcast %cst_44 : f32 to vector<8x128xf32>
    %107 = arith.cmpf oge, %105, %106 : vector<8x128xf32>
    %108 = vector.broadcast %78 : f32 to vector<8x128xf32>
    %109 = arith.mulf %108, %105 : vector<8x128xf32>
    %110 = arith.select %107, %105, %109 : vector<8x128xi1>, vector<8x128xf32>
    %c0_45 = arith.constant 0 : index
    %c0_46 = arith.constant 0 : index
    %111 = vector.load %arg8[%c0_45, %c0_46] : memref<8x128xf32, #tpu.memory_space<vmem>>, vector<8x128xf32>
    tpu.vector_store %arg8[%c0_45, %c0_46], %110 {strides = array<i32>} : memref<8x128xf32, #tpu.memory_space<vmem>>, vector<8x128xf32>,
    return
  }
}

</mosaic_0001>

<llo_original>
// kernel: tpu_custom_call.1
$region0: #{tpu_custom_call.1}
  #allocation0 [shape = 'u32[]', space=smem, size = 0x4, offset = 0x4, fixed_abs, tag = 'smem constant byte address 0x4 - core index']
  #allocation1 [shape = 'u32[144,128]{1,0:T(1,128)}', space=vmem, size = 0x12000, scoped, tag = 'internal scratch']
  #allocation2 [shape = 'bf16[1024,512]{1,0:T(16,128)(2,1)}', space=vmem, size = 0x100000, scoped, tag = 'scratch operand']
  #allocation3 [shape = 'bf16[512,128]{1,0:T(16,128)(2,1)}', space=vmem, size = 0x20000, scoped, tag = 'scratch operand']
  #allocation4 [shape = 's32[2]{0}', space=sflag, size = 0x8, scoped, tag = 'scratch operand']
  #allocation14 [shape = 's32[]', space=sflag, size = 0x4, offset = 0, fixed_abs, tag = 'sflag constant byte address 0x0 - dummy sync flag']
  #allocation16 [shape = 's32[]', space=sflag, size = 0x4, offset = 0, fixed_abs, tag = 'sflag constant byte address 0x0 - dummy sync flag']
  #allocation17 [shape = 's32[]', space=sflag, size = 0x4, offset = 0, fixed_abs, tag = 'sflag constant byte address 0x0 - dummy sync flag']
  #allocation18 [shape = 'u32[]', space=smem, size = 0x4, offset = 0x44, fixed_abs, tag = 'smem constant byte address 0x44 - assertion arg 0']
  #allocation19 [shape = 'u32[]', space=smem, size = 0x4, offset = 0x48, fixed_abs, tag = 'smem constant byte address 0x48 - assertion arg 1']
  %s0 = inlined_call_operand.hbm [shape: f32[8,32], index: 0, kind: input, shape index: {}]
  %s1 = inlined_call_operand.hbm [shape: bf16[32,1024], index: 1, kind: input, shape index: {}]
  %s2 = inlined_call_operand.hbm [shape: f32[2,1024], index: 2, kind: input, shape index: {}]
  %s3 = inlined_call_operand.hbm [shape: bf16[1024,512], index: 3, kind: input, shape index: {}]
  %s4 = inlined_call_operand.vmem [shape: f32[2,512], index: 4, kind: input, shape index: {}]
  %s5 = inlined_call_operand.hbm [shape: bf16[512,128], index: 5, kind: input, shape index: {}]
  %s6 = inlined_call_operand.vmem [shape: f32[2,128], index: 6, kind: input, shape index: {}]
  %s7 = inlined_call_operand.vmem [shape: f32[3], index: 7, kind: input, shape index: {}]
  %s8 = inlined_call_operand.hbm [shape: f32[8,128], index: 8, kind: output, shape index: {}]
  %s9 = sld [smem:[#allocation0]]
  $region54: #{tpu_custom_call.1} parent=0
    _
  %s11 = ssub.s32 1, %s9
  %s12 = scalar_select 0, %s11, %s9
  $region1: #{tpu_custom_call.1} parent=0
    #allocation5 [shape = 'u8[4096]{0}', space=vmem, size = 0x1000, scoped, tag = 'input window, operand 0, single buffered']
    #allocation6 [shape = 's32[1]{0}', space=sflag, size = 0x4, scoped, tag = 'scoped memory for tpu_custom_call.1']
    #allocation7 [shape = 's32[1]{0}', space=sflag, size = 0x4, scoped, tag = 'scoped memory for tpu_custom_call.1']
    #allocation8 [shape = 's32[1]{0}', space=sflag, size = 0x4, scoped, tag = 'scoped memory for tpu_custom_call.1']
    #allocation9 [shape = 'u8[65536]{0}', space=vmem, size = 0x10000, scoped, tag = 'input window, operand 1, single buffered']
    #allocation10 [shape = 's32[1]{0}', space=sflag, size = 0x4, scoped, tag = 'scoped memory for tpu_custom_call.1']
    #allocation11 [shape = 'u8[8192]{0}', space=vmem, size = 0x2000, scoped, tag = 'input window, operand 2, single buffered']
    #allocation12 [shape = 'u8[512]{0}', space=smem, size = 0x200, scoped, tag = 'input window, operand 7, single buffered']
    #allocation13 [shape = 'u8[4096]{0}', space=vmem, size = 0x1000, scoped, tag = 'output window, operand 0, single buffered']
    #allocation15 [shape = 'u32[9]{0}', space=smem, size = 0x24, scoped, tag = 'DMA stride descriptor']
    %13 = vsyncpa [#allocation6], 0
    %14 = vsyncpa [#allocation10], 0
    %15 = vsyncpa [#allocation8], 0
    %16 = vsyncpa [#allocation7], 0
    // Predicated region
    $region2: #{tpu_custom_call.1} parent=1 // pred_check
      _
    $region3: #{tpu_custom_call.1} parent=1 // pred_check_branch
      %18 = sbr.rel (0) target = $region5
    $region4: #{tpu_custom_call.1} parent=1 // pred_region
      %s20 = ssub.s32 128, 128
      %21 = vsyncadd [#allocation6], %s20
      %s23 = sshll.u32 [#allocation5], 4
      %s24 = int_to_ptr.vmem [resolvable:$true] %s23
      %26 = dma.hbm_to_vmem [thread:$0]  %s0, 128, %s24, [#allocation6]
    $region5: #{tpu_custom_call.1} parent=1 // pred_fallthru
      _
    // Predicated region
    $region6: #{tpu_custom_call.1} parent=1 // pred_check
      _
    $region7: #{tpu_custom_call.1} parent=1 // pred_check_branch
      %28 = sbr.rel (0) target = $region9
    $region8: #{tpu_custom_call.1} parent=1 // pred_region
      %s30 = ssub.s32 2048, 2048
      %31 = vsyncadd [#allocation10], %s30
      %s32 = sshll.u32 [#allocation9], 4
      %s33 = int_to_ptr.vmem [resolvable:$true] %s32
      %38 = dma.hbm_to_vmem [thread:$0]  %s1, 2048, %s33, [#allocation10], 512, 512, 32
    $region9: #{tpu_custom_call.1} parent=1 // pred_fallthru
      _
    // Predicated region
    $region10: #{tpu_custom_call.1} parent=1 // pred_check
      _
    $region11: #{tpu_custom_call.1} parent=1 // pred_check_branch
      %40 = sbr.rel (0) target = $region13
    $region12: #{tpu_custom_call.1} parent=1 // pred_region
      %s42 = ssub.s32 256, 256
      %43 = vsyncadd [#allocation10], %s42
      %s45 = sshll.u32 [#allocation11], 4
      %s46 = int_to_ptr.vmem [resolvable:$true] %s45
      %48 = dma.hbm_to_vmem [thread:$0]  %s2, 256, %s46, [#allocation10]
    $region13: #{tpu_custom_call.1} parent=1 // pred_fallthru
      _
    // Predicated region
    $region14: #{tpu_custom_call.1} parent=1 // pred_check
      _
    $region15: #{tpu_custom_call.1} parent=1 // pred_check_branch
      %50 = sbr.rel (0) target = $region17
    $region16: #{tpu_custom_call.1} parent=1 // pred_region
      _
    $region17: #{tpu_custom_call.1} parent=1 // pred_fallthru
      _
    // Predicated region
    $region18: #{tpu_custom_call.1} parent=1 // pred_check
      _
    $region19: #{tpu_custom_call.1} parent=1 // pred_check_branch
      %52 = sbr.rel (0) target = $region21
    $region20: #{tpu_custom_call.1} parent=1 // pred_region
      _
    $region21: #{tpu_custom_call.1} parent=1 // pred_fallthru
      _
    // Predicated region
    $region22: #{tpu_custom_call.1} parent=1 // pred_check
      _
    $region23: #{tpu_custom_call.1} parent=1 // pred_check_branch
      %54 = sbr.rel (0) target = $region25
    $region24: #{tpu_custom_call.1} parent=1 // pred_region
      %s56 = ssub.s32 16, 16
      %57 = vsyncadd [#allocation8], %s56
      %s59 = sshll.u32 %s7, 4
      %s60 = int_to_ptr.vmem [resolvable:$true] %s59
      %62 = dma.vmem_to_smem %s60, 16, [#allocation12], [#allocation8]
    $region25: #{tpu_custom_call.1} parent=1 // pred_fallthru
      _
    // Predicated region
    $region26: #{tpu_custom_call.1} parent=1 // pred_check
      _
    $region27: #{tpu_custom_call.1} parent=1 // pred_check_branch
      %64 = sbr.rel (0) target = $region29
    $region28: #{tpu_custom_call.1} parent=1 // pred_region
      %65 = dma.done [#allocation6], 128
    $region29: #{tpu_custom_call.1} parent=1 // pred_fallthru
      _
    // Predicated region
    $region30: #{tpu_custom_call.1} parent=1 // pred_check
      _
    $region31: #{tpu_custom_call.1} parent=1 // pred_check_branch
      %67 = sbr.rel (0) target = $region33
    $region32: #{tpu_custom_call.1} parent=1 // pred_region
      %68 = dma.done [#allocation10], 2048
    $region33: #{tpu_custom_call.1} parent=1 // pred_fallthru
      _
    // Predicated region
    $region34: #{tpu_custom_call.1} parent=1 // pred_check
      _
    $region35: #{tpu_custom_call.1} parent=1 // pred_check_branch
      %70 = sbr.rel (0) target = $region37
    $region36: #{tpu_custom_call.1} parent=1 // pred_region
      %71 = dma.done [#allocation10], 256
    $region37: #{tpu_custom_call.1} parent=1 // pred_fallthru
      _
    // Predicated region
    $region38: #{tpu_custom_call.1} parent=1 // pred_check
      _
    $region39: #{tpu_custom_call.1} parent=1 // pred_check_branch
      %73 = sbr.rel (0) target = $region41
    $region40: #{tpu_custom_call.1} parent=1 // pred_region
      %74 = dma.done [#allocation8], 16
    $region41: #{tpu_custom_call.1} parent=1 // pred_fallthru
      _
    %75 = sfence
    %s78 = sshll.u32 1, 14
    %s79 = sxor.u32 4294967295, %s78
    %s81 = sld [smem:[#allocation0]]
    %s82 = sadd.s32 2, %s81
    %s84 = sshll.u32 7, 26
    %s85 = sxor.u32 4294967295, %s84
    %s86 = sand.u32 0, %s85
    %s87 = sshll.u32 %s82, 26
    %s88 = sor.u32 %s86, %s87
    %s89 = sshll.u32 [#allocation2], 4
    %s90 = int_to_ptr.vmem [resolvable:$true] %s89
    %93 = sst [smem:[#allocation15]] 512
    %s94 = scalar_lea.smem [#allocation15], 1
    %95 = sst [smem:[%s94]] 512
    %s96 = scalar_lea.smem [#allocation15], 2
    %97 = sst [smem:[%s96]] 4
    %s98 = scalar_lea.smem [#allocation15], 3
    %99 = sst [smem:[%s98]] 64
    %s100 = scalar_lea.smem [#allocation15], 4
    %101 = sst [smem:[%s100]] 128
    %s102 = scalar_lea.smem [#allocation15], 5
    %103 = sst [smem:[%s102]] 2
    %s104 = scalar_lea.smem [#allocation15], 6
    %105 = sst [smem:[%s104]] 256
    %s106 = scalar_lea.smem [#allocation15], 7
    %107 = sst [smem:[%s106]] 64
    %s108 = scalar_lea.smem [#allocation15], 8
    %109 = sst [smem:[%s108]] 4
    %111 = dma.general %s3, 32768, %s90, [#allocation4], [#allocation14], [#allocation15], %s88, 0
    %s112 = scalar_lea.sflag [#allocation4], 1
    // Predicated region
    $region42: #{tpu_custom_call.1} parent=1 // pred_check
      _
    $region43: #{tpu_custom_call.1} parent=1 // pred_check_branch
      %114 = sbr.rel target = $region45
    $region44: #{tpu_custom_call.1} parent=1 // pred_region
      %115 = sst [smem:[#allocation18]] [#allocation17]
      %116 = sst [smem:[#allocation19]] [#allocation16]
    $region45: #{tpu_custom_call.1} parent=1 // pred_fallthru
      _
    %118 = shalt.err (0)
    %s120 = sshll.u32 [#allocation3], 4
    %s121 = int_to_ptr.vmem [resolvable:$true] %s120
    %123 = dma.hbm_to_vmem [thread:$0]  %s5, 4096, %s121, %s112
    %v124 = vld [vmem:[#allocation5] sm:$0xff]
    %v125 = vld [vmem:[#allocation9] sm:$0xff]
    %v126 = vld [vmem:[#allocation9 + $0x8] sm:$0xff]
    %v127 = vld [vmem:[#allocation9 + $0x10] sm:$0xff]
    %v128 = vld [vmem:[#allocation9 + $0x18] sm:$0xff]
    %v129 = vld [vmem:[#allocation9 + $0x20] sm:$0xff]
    %v130 = vld [vmem:[#allocation9 + $0x28] sm:$0xff]
    %v131 = vld [vmem:[#allocation9 + $0x30] sm:$0xff]
    %v132 = vld [vmem:[#allocation9 + $0x38] sm:$0xff]
    %v133 = vld [vmem:[#allocation9 + $0x40] sm:$0xff]
    %v134 = vld [vmem:[#allocation9 + $0x48] sm:$0xff]
    %v135 = vld [vmem:[#allocation9 + $0x50] sm:$0xff]
    %v136 = vld [vmem:[#allocation9 + $0x58] sm:$0xff]
    %v137 = vld [vmem:[#allocation9 + $0x60] sm:$0xff]
    %v138 = vld [vmem:[#allocation9 + $0x68] sm:$0xff]
    %v139 = vld [vmem:[#allocation9 + $0x70] sm:$0xff]
    %v140 = vld [vmem:[#allocation9 + $0x78] sm:$0xff]
    %s141 = sld [smem:[#allocation12]]
    %v142 = vpack.c.bf16 %v124, %v124
    %v159 = vunpack.c.l.b16 %v125
    %v160 = vunpack.c.h.b16 %v125
    %v161 = vunpack.c.l.b16 %v126
    %v162 = vunpack.c.h.b16 %v126
    %v163 = vunpack.c.l.b16 %v127
    %v164 = vunpack.c.h.b16 %v127
    %v165 = vunpack.c.l.b16 %v128
    %v166 = vunpack.c.h.b16 %v128
    %v167 = vunpack.c.l.b16 %v129
    %v168 = vunpack.c.h.b16 %v129
    %v169 = vunpack.c.l.b16 %v130
    %v170 = vunpack.c.h.b16 %v130
    %v171 = vunpack.c.l.b16 %v131
    %v172 = vunpack.c.h.b16 %v131
    %v173 = vunpack.c.l.b16 %v132
    %v174 = vunpack.c.h.b16 %v132
    %v175 = vunpack.c.l.b16 %v133
    %v176 = vunpack.c.h.b16 %v133
    %v177 = vunpack.c.l.b16 %v134
    %v178 = vunpack.c.h.b16 %v134
    %v179 = vunpack.c.l.b16 %v135
    %v180 = vunpack.c.h.b16 %v135
    %v181 = vunpack.c.l.b16 %v136
    %v182 = vunpack.c.h.b16 %v136
    %v183 = vunpack.c.l.b16 %v137
    %v184 = vunpack.c.h.b16 %v137
    %v185 = vunpack.c.l.b16 %v138
    %v186 = vunpack.c.h.b16 %v138
    %v187 = vunpack.c.l.b16 %v139
    %v188 = vunpack.c.h.b16 %v139
    %v189 = vunpack.c.l.b16 %v140
    %v190 = vunpack.c.h.b16 %v140
    %v191 = vpack.c.b16 %v167, %v159
    %v192 = vpack.c.b16 %v168, %v160
    %v193 = vpack.c.b16 %v169, %v161
    %v194 = vpack.c.b16 %v170, %v162
    %v195 = vpack.c.b16 %v171, %v163
    %v196 = vpack.c.b16 %v172, %v164
    %v197 = vpack.c.b16 %v173, %v165
    %v198 = vpack.c.b16 %v174, %v166
    %v199 = vpack.c.b16 %v183, %v175
    %v200 = vpack.c.b16 %v184, %v176
    %v201 = vpack.c.b16 %v185, %v177
    %v202 = vpack.c.b16 %v186, %v178
    %v203 = vpack.c.b16 %v187, %v179
    %v204 = vpack.c.b16 %v188, %v180
    %v205 = vpack.c.b16 %v189, %v181
    %v206 = vpack.c.b16 %v190, %v182
    %vm223 = vcmask 261120
    %v225 = vsel %vm223, %v142, 0
    %227 = vmatprep.subr.bf16.mxu0 %v192
    %228 = vmatpush1.bf16.msra.mxu0 %v191
    %229 = vmatprep.subr.bf16.mxu0 %v200
    %230 = vmatpush1.bf16.msra.mxu0 %v199
    %231 = vmatprep.subr.bf16.mxu0 0
    %232 = vmatpush1.bf16.msra.mxu0 0
    %233 = vmatprep.subr.bf16.mxu0 0
    %234 = vmatpush1.bf16.msra.mxu0 0
    %235 = vmatprep.subr.bf16.mxu0 0
    %236 = vmatpush1.bf16.msra.mxu0 0
    %237 = vmatprep.subr.bf16.mxu0 0
    %238 = vmatpush1.bf16.msra.mxu0 0
    %239 = vmatprep.subr.bf16.mxu0 0
    %240 = vmatpush1.bf16.msra.mxu0 0
    %241 = vmatprep.subr.bf16.mxu0 0
    %242 = vmatpush1.bf16.msra.mxu0 0
    %243 = vmatprep.subr.bf16.mxu0 0
    %244 = vmatpush1.bf16.msra.mxu0 0
    %245 = vmatprep.subr.bf16.mxu0 0
    %246 = vmatpush1.bf16.msra.mxu0 0
    %247 = vmatprep.subr.bf16.mxu0 0
    %248 = vmatpush1.bf16.msra.mxu0 0
    %249 = vmatprep.subr.bf16.mxu0 0
    %250 = vmatpush1.bf16.msra.mxu0 0
    %251 = vmatprep.subr.bf16.mxu0 0
    %252 = vmatpush1.bf16.msra.mxu0 0
    %253 = vmatprep.subr.bf16.mxu0 0
    %254 = vmatpush1.bf16.msra.mxu0 0
    %255 = vmatprep.subr.bf16.mxu0 0
    %256 = vmatpush1.bf16.msra.mxu0 0
    %257 = vmatprep.subr.bf16.mxu0 0
    %258 = vmatpush1.bf16.msra.mxu0 0
    %259 = vmatprep.mubr.bf16.mxu0 0
    %260 = vmatmul.mubr.bf16.gmra.mrb[0].mxu0 %v225
    %v261 = vpop.f32.mrb[0].mxu0
    %v262 = vadd.f32 0.0, %v261
    %v263 = vpop.f32.mrb[0].mxu0
    %v264 = vadd.f32 0.0, %v263
    %v265 = vpop.f32.mrb[0].mxu0
    %v266 = vpop.f32.mrb[0].mxu0
    %267 = vdwg.mxu0
    %268 = vmatprep.subr.bf16.mxu0 %v194
    %269 = vmatpush1.bf16.msra.mxu0 %v193
    %270 = vmatprep.subr.bf16.mxu0 %v202
    %271 = vmatpush1.bf16.msra.mxu0 %v201
    %272 = vmatprep.subr.bf16.mxu0 0
    %273 = vmatpush1.bf16.msra.mxu0 0
    %274 = vmatprep.subr.bf16.mxu0 0
    %275 = vmatpush1.bf16.msra.mxu0 0
    %276 = vmatprep.subr.bf16.mxu0 0
    %277 = vmatpush1.bf16.msra.mxu0 0
    %278 = vmatprep.subr.bf16.mxu0 0
    %279 = vmatpush1.bf16.msra.mxu0 0
    %280 = vmatprep.subr.bf16.mxu0 0
    %281 = vmatpush1.bf16.msra.mxu0 0
    %282 = vmatprep.subr.bf16.mxu0 0
    %283 = vmatpush1.bf16.msra.mxu0 0
    %284 = vmatprep.subr.bf16.mxu0 0
    %285 = vmatpush1.bf16.msra.mxu0 0
    %286 = vmatprep.subr.bf16.mxu0 0
    %287 = vmatpush1.bf16.msra.mxu0 0
    %288 = vmatprep.subr.bf16.mxu0 0
    %289 = vmatpush1.bf16.msra.mxu0 0
    %290 = vmatprep.subr.bf16.mxu0 0
    %291 = vmatpush1.bf16.msra.mxu0 0
    %292 = vmatprep.subr.bf16.mxu0 0
    %293 = vmatpush1.bf16.msra.mxu0 0
    %294 = vmatprep.subr.bf16.mxu0 0
    %295 = vmatpush1.bf16.msra.mxu0 0
    %296 = vmatprep.subr.bf16.mxu0 0
    %297 = vmatpush1.bf16.msra.mxu0 0
    %298 = vmatprep.subr.bf16.mxu0 0
    %299 = vmatpush1.bf16.msra.mxu0 0
    %300 = vmatprep.mubr.bf16.mxu0 0
    %301 = vmatmul.mubr.bf16.gmra.mrb[0].mxu0 %v225
    %v302 = vpop.f32.mrb[0].mxu0
    %v303 = vadd.f32 0.0, %v302
    %v304 = vpop.f32.mrb[0].mxu0
    %v305 = vadd.f32 0.0, %v304
    %v306 = vpop.f32.mrb[0].mxu0
    %v307 = vpop.f32.mrb[0].mxu0
    %308 = vdwg.mxu0
    %309 = vmatprep.subr.bf16.mxu0 %v196
    %310 = vmatpush1.bf16.msra.mxu0 %v195
    %311 = vmatprep.subr.bf16.mxu0 %v204
    %312 = vmatpush1.bf16.msra.mxu0 %v203
    %313 = vmatprep.subr.bf16.mxu0 0
    %314 = vmatpush1.bf16.msra.mxu0 0
    %315 = vmatprep.subr.bf16.mxu0 0
    %316 = vmatpush1.bf16.msra.mxu0 0
    %317 = vmatprep.subr.bf16.mxu0 0
    %318 = vmatpush1.bf16.msra.mxu0 0
    %319 = vmatprep.subr.bf16.mxu0 0
    %320 = vmatpush1.bf16.msra.mxu0 0
    %321 = vmatprep.subr.bf16.mxu0 0
    %322 = vmatpush1.bf16.msra.mxu0 0
    %323 = vmatprep.subr.bf16.mxu0 0
    %324 = vmatpush1.bf16.msra.mxu0 0
    %325 = vmatprep.subr.bf16.mxu0 0
    %326 = vmatpush1.bf16.msra.mxu0 0
    %327 = vmatprep.subr.bf16.mxu0 0
    %328 = vmatpush1.bf16.msra.mxu0 0
    %329 = vmatprep.subr.bf16.mxu0 0
    %330 = vmatpush1.bf16.msra.mxu0 0
    %331 = vmatprep.subr.bf16.mxu0 0
    %332 = vmatpush1.bf16.msra.mxu0 0
    %333 = vmatprep.subr.bf16.mxu0 0
    %334 = vmatpush1.bf16.msra.mxu0 0
    %335 = vmatprep.subr.bf16.mxu0 0
    %336 = vmatpush1.bf16.msra.mxu0 0
    %337 = vmatprep.subr.bf16.mxu0 0
    %338 = vmatpush1.bf16.msra.mxu0 0
    %339 = vmatprep.subr.bf16.mxu0 0
    %340 = vmatpush1.bf16.msra.mxu0 0
    %341 = vmatprep.mubr.bf16.mxu0 0
    %342 = vmatmul.mubr.bf16.gmra.mrb[0].mxu0 %v225
    %v343 = vpop.f32.mrb[0].mxu0
    %v344 = vadd.f32 0.0, %v343
    %v345 = vpop.f32.mrb[0].mxu0
    %v346 = vadd.f32 0.0, %v345
    %v347 = vpop.f32.mrb[0].mxu0
    %v348 = vpop.f32.mrb[0].mxu0
    %349 = vdwg.mxu0
    %350 = vmatprep.subr.bf16.mxu0 %v198
    %351 = vmatpush1.bf16.msra.mxu0 %v197
    %352 = vmatprep.subr.bf16.mxu0 %v206
    %353 = vmatpush1.bf16.msra.mxu0 %v205
    %354 = vmatprep.subr.bf16.mxu0 0
    %355 = vmatpush1.bf16.msra.mxu0 0
    %356 = vmatprep.subr.bf16.mxu0 0
    %357 = vmatpush1.bf16.msra.mxu0 0
    %358 = vmatprep.subr.bf16.mxu0 0
    %359 = vmatpush1.bf16.msra.mxu0 0
    %360 = vmatprep.subr.bf16.mxu0 0
    %361 = vmatpush1.bf16.msra.mxu0 0
    %362 = vmatprep.subr.bf16.mxu0 0
    %363 = vmatpush1.bf16.msra.mxu0 0
    %364 = vmatprep.subr.bf16.mxu0 0
    %365 = vmatpush1.bf16.msra.mxu0 0
    %366 = vmatprep.subr.bf16.mxu0 0
    %367 = vmatpush1.bf16.msra.mxu0 0
    %368 = vmatprep.subr.bf16.mxu0 0
    %369 = vmatpush1.bf16.msra.mxu0 0
    %370 = vmatprep.subr.bf16.mxu0 0
    %371 = vmatpush1.bf16.msra.mxu0 0
    %372 = vmatprep.subr.bf16.mxu0 0
    %373 = vmatpush1.bf16.msra.mxu0 0
    %374 = vmatprep.subr.bf16.mxu0 0
    %375 = vmatpush1.bf16.msra.mxu0 0
    %376 = vmatprep.subr.bf16.mxu0 0
    %377 = vmatpush1.bf16.msra.mxu0 0
    %378 = vmatprep.subr.bf16.mxu0 0
    %379 = vmatpush1.bf16.msra.mxu0 0
    %380 = vmatprep.subr.bf16.mxu0 0
    %381 = vmatpush1.bf16.msra.mxu0 0
    %382 = vmatprep.mubr.bf16.mxu0 0
    %383 = vmatmul.mubr.bf16.gmra.mrb[0].mxu0 %v225
    %v384 = vpop.f32.mrb[0].mxu0
    %v385 = vadd.f32 0.0, %v384
    %v386 = vpop.f32.mrb[0].mxu0
    %v387 = vadd.f32 0.0, %v386
    %v388 = vpop.f32.mrb[0].mxu0
    %v389 = vpop.f32.mrb[0].mxu0
    %390 = vdwg.mxu0
    %v391 = vrot.slane %v262, 4
    %v392 = vadd.f32 %v262, %v391
    %v393 = vrot.slane %v392, 2
    %v394 = vadd.f32 %v392, %v393
    %v395 = vrot.slane %v394, 1
    %v396 = vadd.f32 %v394, %v395
    %v397 = vrot.slane %v264, 4
    %v398 = vadd.f32 %v264, %v397
    %v399 = vrot.slane %v398, 2
    %v400 = vadd.f32 %v398, %v399
    %v401 = vrot.slane %v400, 1
    %v402 = vadd.f32 %v400, %v401
    %v403 = vrot.slane %v303, 4
    %v404 = vadd.f32 %v303, %v403
    %v405 = vrot.slane %v404, 2
    %v406 = vadd.f32 %v404, %v405
    %v407 = vrot.slane %v406, 1
    %v408 = vadd.f32 %v406, %v407
    %v409 = vrot.slane %v305, 4
    %v410 = vadd.f32 %v305, %v409
    %v411 = vrot.slane %v410, 2
    %v412 = vadd.f32 %v410, %v411
    %v413 = vrot.slane %v412, 1
    %v414 = vadd.f32 %v412, %v413
    %v415 = vrot.slane %v344, 4
    %v416 = vadd.f32 %v344, %v415
    %v417 = vrot.slane %v416, 2
    %v418 = vadd.f32 %v416, %v417
    %v419 = vrot.slane %v418, 1
    %v420 = vadd.f32 %v418, %v419
    %v421 = vrot.slane %v346, 4
    %v422 = vadd.f32 %v346, %v421
    %v423 = vrot.slane %v422, 2
    %v424 = vadd.f32 %v422, %v423
    %v425 = vrot.slane %v424, 1
    %v426 = vadd.f32 %v424, %v425
    %v427 = vrot.slane %v385, 4
    %v428 = vadd.f32 %v385, %v427
    %v429 = vrot.slane %v428, 2
    %v430 = vadd.f32 %v428, %v429
    %v431 = vrot.slane %v430, 1
    %v432 = vadd.f32 %v430, %v431
    %v433 = vrot.slane %v387, 4
    %v434 = vadd.f32 %v387, %v433
    %v435 = vrot.slane %v434, 2
    %v436 = vadd.f32 %v434, %v435
    %v437 = vrot.slane %v436, 1
    %v438 = vadd.f32 %v436, %v437
    %v439 = vrcp.pop 8.0
    %v440 = vmul.f32 %v396, %v439
    %v441 = vmul.f32 %v402, %v439
    %v442 = vmul.f32 %v408, %v439
    %v443 = vmul.f32 %v414, %v439
    %v444 = vmul.f32 %v420, %v439
    %v445 = vmul.f32 %v426, %v439
    %v446 = vmul.f32 %v432, %v439
    %v447 = vmul.f32 %v438, %v439
    %v448 = vmul.f32 %v262, %v262
    %v449 = vmul.f32 %v264, %v264
    %v450 = vmul.f32 %v303, %v303
    %v451 = vmul.f32 %v305, %v305
    %v452 = vmul.f32 %v344, %v344
    %v453 = vmul.f32 %v346, %v346
    %v454 = vmul.f32 %v385, %v385
    %v455 = vmul.f32 %v387, %v387
    %v456 = vrot.slane %v448, 4
    %v457 = vadd.f32 %v448, %v456
    %v458 = vrot.slane %v457, 2
    %v459 = vadd.f32 %v457, %v458
    %v460 = vrot.slane %v459, 1
    %v461 = vadd.f32 %v459, %v460
    %v462 = vrot.slane %v449, 4
    %v463 = vadd.f32 %v449, %v462
    %v464 = vrot.slane %v463, 2
    %v465 = vadd.f32 %v463, %v464
    %v466 = vrot.slane %v465, 1
    %v467 = vadd.f32 %v465, %v466
    %v468 = vrot.slane %v450, 4
    %v469 = vadd.f32 %v450, %v468
    %v470 = vrot.slane %v469, 2
    %v471 = vadd.f32 %v469, %v470
    %v472 = vrot.slane %v471, 1
    %v473 = vadd.f32 %v471, %v472
    %v474 = vrot.slane %v451, 4
    %v475 = vadd.f32 %v451, %v474
    %v476 = vrot.slane %v475, 2
    %v477 = vadd.f32 %v475, %v476
    %v478 = vrot.slane %v477, 1
    %v479 = vadd.f32 %v477, %v478
    %v480 = vrot.slane %v452, 4
    %v481 = vadd.f32 %v452, %v480
    %v482 = vrot.slane %v481, 2
    %v483 = vadd.f32 %v481, %v482
    %v484 = vrot.slane %v483, 1
    %v485 = vadd.f32 %v483, %v484
    %v486 = vrot.slane %v453, 4
    %v487 = vadd.f32 %v453, %v486
    %v488 = vrot.slane %v487, 2
    %v489 = vadd.f32 %v487, %v488
    %v490 = vrot.slane %v489, 1
    %v491 = vadd.f32 %v489, %v490
    %v492 = vrot.slane %v454, 4
    %v493 = vadd.f32 %v454, %v492
    %v494 = vrot.slane %v493, 2
    %v495 = vadd.f32 %v493, %v494
    %v496 = vrot.slane %v495, 1
    %v497 = vadd.f32 %v495, %v496
    %v498 = vrot.slane %v455, 4
    %v499 = vadd.f32 %v455, %v498
    %v500 = vrot.slane %v499, 2
    %v501 = vadd.f32 %v499, %v500
    %v502 = vrot.slane %v501, 1
    %v503 = vadd.f32 %v501, %v502
    %v504 = vmul.f32 %v461, %v439
    %v505 = vmul.f32 %v467, %v439
    %v506 = vmul.f32 %v473, %v439
    %v507 = vmul.f32 %v479, %v439
    %v508 = vmul.f32 %v485, %v439
    %v509 = vmul.f32 %v491, %v439
    %v510 = vmul.f32 %v497, %v439
    %v511 = vmul.f32 %v503, %v439
    %v512 = vmul.f32 %v440, %v440
    %v513 = vmul.f32 %v441, %v441
    %v514 = vmul.f32 %v442, %v442
    %v515 = vmul.f32 %v443, %v443
    %v516 = vmul.f32 %v444, %v444
    %v517 = vmul.f32 %v445, %v445
    %v518 = vmul.f32 %v446, %v446
    %v519 = vmul.f32 %v447, %v447
    %v520 = vsub.f32 %v504, %v512
    %v521 = vsub.f32 %v505, %v513
    %v522 = vsub.f32 %v506, %v514
    %v523 = vsub.f32 %v507, %v515
    %v524 = vsub.f32 %v508, %v516
    %v525 = vsub.f32 %v509, %v517
    %v526 = vsub.f32 %v510, %v518
    %v527 = vsub.f32 %v511, %v519
    %v528 = vmax.f32 %v520, 0.0
    %v529 = vmax.f32 %v521, 0.0
    %v530 = vmax.f32 %v522, 0.0
    %v531 = vmax.f32 %v523, 0.0
    %v532 = vmax.f32 %v524, 0.0
    %v533 = vmax.f32 %v525, 0.0
    %v534 = vmax.f32 %v526, 0.0
    %v535 = vmax.f32 %v527, 0.0
    %v536 = vld [vmem:[#allocation11] ss:$2 sm:$0xff]
    %s537 = scalar_lea.vmem [#allocation11], 1
    %v538 = vld [vmem:[%s537] ss:$2 sm:$0xff]
    %v539 = vadd.f32 %v528, 1e-05
    %v540 = vadd.f32 %v529, 1e-05
    %v541 = vadd.f32 %v530, 1e-05
    %v542 = vadd.f32 %v531, 1e-05
    %v543 = vadd.f32 %v532, 1e-05
    %v544 = vadd.f32 %v533, 1e-05
    %v545 = vadd.f32 %v534, 1e-05
    %v546 = vadd.f32 %v535, 1e-05
    %v547 = vrsqrt.pop %v539
    %v548 = vrsqrt.pop %v540
    %v549 = vrsqrt.pop %v541
    %v550 = vrsqrt.pop %v542
    %v551 = vrsqrt.pop %v543
    %v552 = vrsqrt.pop %v544
    %v553 = vrsqrt.pop %v545
    %v554 = vrsqrt.pop %v546
    %v563 = vcombine.low %v547, %v548
    %v564 = vcombine.low %v549, %v550
    %v565 = vcombine.low %v551, %v552
    %v566 = vcombine.low %v553, %v554
    %v568 = vunpack.c.l.s4 1966171168
    %v569 = vunpack.c.0.s8 %v568
    %v570 = vlaneseq
    %v571 = vshrl.u32 %v570, 7
    %v572 = vsub.s32 %v569, %v571
    %v573 = vrot.slane %v563, %v572
    %v575 = vunpack.c.l.s4 1966171168
    %v576 = vunpack.c.0.s8 %v575
    %v577 = vlaneseq
    %v578 = vshrl.u32 %v577, 7
    %v579 = vsub.s32 %v576, %v578
    %v580 = vrot.slane %v564, %v579
    %v582 = vunpack.c.l.s4 1966171168
    %v583 = vunpack.c.0.s8 %v582
    %v584 = vlaneseq
    %v585 = vshrl.u32 %v584, 7
    %v586 = vsub.s32 %v583, %v585
    %v587 = vrot.slane %v565, %v586
    %v589 = vunpack.c.l.s4 1966171168
    %v590 = vunpack.c.0.s8 %v589
    %v591 = vlaneseq
    %v592 = vshrl.u32 %v591, 7
    %v593 = vsub.s32 %v590, %v592
    %v594 = vrot.slane %v566, %v593
    %v595 = vcombine.low %v573, %v580
    %v596 = vcombine.low %v587, %v594
    %v598 = vunpack.c.l.s4 1966171168
    %v599 = vunpack.c.0.s8 %v598
    %v600 = vlaneseq
    %v601 = vshrl.u32 %v600, 7
    %v602 = vsub.s32 %v599, %v601
    %v603 = vrot.slane %v595, %v602
    %v605 = vunpack.c.l.s4 1966171168
    %v606 = vunpack.c.0.s8 %v605
    %v607 = vlaneseq
    %v608 = vshrl.u32 %v607, 7
    %v609 = vsub.s32 %v606, %v608
    %v610 = vrot.slane %v596, %v609
    %v611 = vcombine.low %v603, %v610
    %v613 = vmul.f32 %v536, %v611
    %v615 = vlaneseq
    %v616 = vshrl.u32 %v615, 7
    %v617 = vsub.s32 0, %v616
    %v618 = vrot.slane %v613, %v617
    %v619 = vlaneseq
    %v620 = vshrl.u32 %v619, 7
    %v621 = vsub.s32 1, %v620
    %v622 = vrot.slane %v613, %v621
    %v623 = vlaneseq
    %v624 = vshrl.u32 %v623, 7
    %v625 = vsub.s32 2, %v624
    %v626 = vrot.slane %v613, %v625
    %v627 = vlaneseq
    %v628 = vshrl.u32 %v627, 7
    %v629 = vsub.s32 3, %v628
    %v630 = vrot.slane %v613, %v629
    %v631 = vlaneseq
    %v632 = vshrl.u32 %v631, 7
    %v633 = vsub.s32 4, %v632
    %v634 = vrot.slane %v613, %v633
    %v635 = vlaneseq
    %v636 = vshrl.u32 %v635, 7
    %v637 = vsub.s32 5, %v636
    %v638 = vrot.slane %v613, %v637
    %v639 = vlaneseq
    %v640 = vshrl.u32 %v639, 7
    %v641 = vsub.s32 6, %v640
    %v642 = vrot.slane %v613, %v641
    %v643 = vlaneseq
    %v644 = vshrl.u32 %v643, 7
    %v645 = vsub.s32 7, %v644
    %v646 = vrot.slane %v613, %v645
    %v655 = vmul.f32 %v262, %v618
    %v656 = vmul.f32 %v264, %v622
    %v657 = vmul.f32 %v303, %v626
    %v658 = vmul.f32 %v305, %v630
    %v659 = vmul.f32 %v344, %v634
    %v660 = vmul.f32 %v346, %v638
    %v661 = vmul.f32 %v385, %v642
    %v662 = vmul.f32 %v387, %v646
    %v663 = vmul.f32 %v440, %v618
    %v664 = vmul.f32 %v441, %v622
    %v665 = vmul.f32 %v442, %v626
    %v666 = vmul.f32 %v443, %v630
    %v667 = vmul.f32 %v444, %v634
    %v668 = vmul.f32 %v445, %v638
    %v669 = vmul.f32 %v446, %v642
    %v670 = vmul.f32 %v447, %v646
    %v679 = vcombine.low %v663, %v664
    %v680 = vcombine.low %v665, %v666
    %v681 = vcombine.low %v667, %v668
    %v682 = vcombine.low %v669, %v670
    %v684 = vunpack.c.l.s4 1966171168
    %v685 = vunpack.c.0.s8 %v684
    %v686 = vlaneseq
    %v687 = vshrl.u32 %v686, 7
    %v688 = vsub.s32 %v685, %v687
    %v689 = vrot.slane %v679, %v688
    %v691 = vunpack.c.l.s4 1966171168
    %v692 = vunpack.c.0.s8 %v691
    %v693 = vlaneseq
    %v694 = vshrl.u32 %v693, 7
    %v695 = vsub.s32 %v692, %v694
    %v696 = vrot.slane %v680, %v695
    %v698 = vunpack.c.l.s4 1966171168
    %v699 = vunpack.c.0.s8 %v698
    %v700 = vlaneseq
    %v701 = vshrl.u32 %v700, 7
    %v702 = vsub.s32 %v699, %v701
    %v703 = vrot.slane %v681, %v702
    %v705 = vunpack.c.l.s4 1966171168
    %v706 = vunpack.c.0.s8 %v705
    %v707 = vlaneseq
    %v708 = vshrl.u32 %v707, 7
    %v709 = vsub.s32 %v706, %v708
    %v710 = vrot.slane %v682, %v709
    %v711 = vcombine.low %v689, %v696
    %v712 = vcombine.low %v703, %v710
    %v714 = vunpack.c.l.s4 1966171168
    %v715 = vunpack.c.0.s8 %v714
    %v716 = vlaneseq
    %v717 = vshrl.u32 %v716, 7
    %v718 = vsub.s32 %v715, %v717
    %v719 = vrot.slane %v711, %v718
    %v721 = vunpack.c.l.s4 1966171168
    %v722 = vunpack.c.0.s8 %v721
    %v723 = vlaneseq
    %v724 = vshrl.u32 %v723, 7
    %v725 = vsub.s32 %v722, %v724
    %v726 = vrot.slane %v712, %v725
    %v727 = vcombine.low %v719, %v726
    %v729 = vsub.f32 %v538, %v727
    %v731 = vlaneseq
    %v732 = vshrl.u32 %v731, 7
    %v733 = vsub.s32 0, %v732
    %v734 = vrot.slane %v729, %v733
    %v735 = vlaneseq
    %v736 = vshrl.u32 %v735, 7
    %v737 = vsub.s32 1, %v736
    %v738 = vrot.slane %v729, %v737
    %v739 = vlaneseq
    %v740 = vshrl.u32 %v739, 7
    %v741 = vsub.s32 2, %v740
    %v742 = vrot.slane %v729, %v741
    %v743 = vlaneseq
    %v744 = vshrl.u32 %v743, 7
    %v745 = vsub.s32 3, %v744
    %v746 = vrot.slane %v729, %v745
    %v747 = vlaneseq
    %v748 = vshrl.u32 %v747, 7
    %v749 = vsub.s32 4, %v748
    %v750 = vrot.slane %v729, %v749
    %v751 = vlaneseq
    %v752 = vshrl.u32 %v751, 7
    %v753 = vsub.s32 5, %v752
    %v754 = vrot.slane %v729, %v753
    %v755 = vlaneseq
    %v756 = vshrl.u32 %v755, 7
    %v757 = vsub.s32 6, %v756
    %v758 = vrot.slane %v729, %v757
    %v759 = vlaneseq
    %v760 = vshrl.u32 %v759, 7
    %v761 = vsub.s32 7, %v760
    %v762 = vrot.slane %v729, %v761
    %v771 = vadd.f32 %v655, %v734
    %v772 = vadd.f32 %v656, %v738
    %v773 = vadd.f32 %v657, %v742
    %v774 = vadd.f32 %v658, %v746
    %v775 = vadd.f32 %v659, %v750
    %v776 = vadd.f32 %v660, %v754
    %v777 = vadd.f32 %v661, %v758
    %v778 = vadd.f32 %v662, %v762
    %vm779 = vcmp.ge.f32.partialorder %v771, 0.0
    %vm780 = vcmp.ge.f32.partialorder %v772, 0.0
    %vm781 = vcmp.ge.f32.partialorder %v773, 0.0
    %vm782 = vcmp.ge.f32.partialorder %v774, 0.0
    %vm783 = vcmp.ge.f32.partialorder %v775, 0.0
    %vm784 = vcmp.ge.f32.partialorder %v776, 0.0
    %vm785 = vcmp.ge.f32.partialorder %v777, 0.0
    %vm786 = vcmp.ge.f32.partialorder %v778, 0.0
    %v787 = vstv %s141
    %v788 = vmul.f32 %v787, %v771
    %v789 = vmul.f32 %v787, %v772
    %v790 = vmul.f32 %v787, %v773
    %v791 = vmul.f32 %v787, %v774
    %v792 = vmul.f32 %v787, %v775
    %v793 = vmul.f32 %v787, %v776
    %v794 = vmul.f32 %v787, %v777
    %v795 = vmul.f32 %v787, %v778
    %v796 = vsel %vm779, %v771, %v788
    %v797 = vsel %vm780, %v772, %v789
    %v798 = vsel %vm781, %v773, %v790
    %v799 = vsel %vm782, %v774, %v791
    %v800 = vsel %vm783, %v775, %v792
    %v801 = vsel %vm784, %v776, %v793
    %v802 = vsel %vm785, %v777, %v794
    %v803 = vsel %vm786, %v778, %v795
    %s804 = smul.u32 4, 128
    %s805 = smul.u32 %s804, 4
    %s806 = sshll.u32 %s805, 4
    %807 = dma.done [#allocation4], %s806
    %v808 = vld [vmem:[#allocation2] sm:$0xff]
    %v809 = vld [vmem:[#allocation2 + $0x8] sm:$0xff]
    %v810 = vld [vmem:[#allocation2 + $0x10] sm:$0xff]
    %v811 = vld [vmem:[#allocation2 + $0x18] sm:$0xff]
    %v812 = vld [vmem:[#allocation2 + $0x20] sm:$0xff]
    %v813 = vld [vmem:[#allocation2 + $0x28] sm:$0xff]
    %v814 = vld [vmem:[#allocation2 + $0x30] sm:$0xff]
    %v815 = vld [vmem:[#allocation2 + $0x38] sm:$0xff]
    %v816 = vld [vmem:[#allocation2 + $0x40] sm:$0xff]
    %v817 = vld [vmem:[#allocation2 + $0x48] sm:$0xff]
    %v818 = vld [vmem:[#allocation2 + $0x50] sm:$0xff]
    %v819 = vld [vmem:[#allocation2 + $0x58] sm:$0xff]
    %v820 = vld [vmem:[#allocation2 + $0x60] sm:$0xff]
    %v821 = vld [vmem:[#allocation2 + $0x68] sm:$0xff]
    %v822 = vld [vmem:[#allocation2 + $0x70] sm:$0xff]
    %v823 = vld [vmem:[#allocation2 + $0x78] sm:$0xff]
    %v824 = vld [vmem:[#allocation2 + $0x80] sm:$0xff]
    %v825 = vld [vmem:[#allocation2 + $0x88] sm:$0xff]
    %v826 = vld [vmem:[#allocation2 + $0x90] sm:$0xff]
    %v827 = vld [vmem:[#allocation2 + $0x98] sm:$0xff]
    %v828 = vld [vmem:[#allocation2 + $0xa0] sm:$0xff]
    %v829 = vld [vmem:[#allocation2 + $0xa8] sm:$0xff]
    %v830 = vld [vmem:[#allocation2 + $0xb0] sm:$0xff]
    %v831 = vld [vmem:[#allocation2 + $0xb8] sm:$0xff]
    %v832 = vld [vmem:[#allocation2 + $0xc0] sm:$0xff]
    %v833 = vld [vmem:[#allocation2 + $0xc8] sm:$0xff]
    %v834 = vld [vmem:[#allocation2 + $0xd0] sm:$0xff]
    %v835 = vld [vmem:[#allocation2 + $0xd8] sm:$0xff]
    %v836 = vld [vmem:[#allocation2 + $0xe0] sm:$0xff]
    %v837 = vld [vmem:[#allocation2 + $0xe8] sm:$0xff]
    %v838 = vld [vmem:[#allocation2 + $0xf0] sm:$0xff]
    %v839 = vld [vmem:[#allocation2 + $0xf8] sm:$0xff]
    %v840 = vld [vmem:[#allocation2 + $0x100] sm:$0xff]
    %v841 = vld [vmem:[#allocation2 + $0x108] sm:$0xff]
    %v842 = vld [vmem:[#allocation2 + $0x110] sm:$0xff]
    %v843 = vld [vmem:[#allocation2 + $0x118] sm:$0xff]
    %v844 = vld [vmem:[#allocation2 + $0x120] sm:$0xff]
    %v845 = vld [vmem:[#allocation2 + $0x128] sm:$0xff]
    %v846 = vld [vmem:[#allocation2 + $0x130] sm:$0xff]
    %v847 = vld [vmem:[#allocation2 + $0x138] sm:$0xff]
    %v848 = vld [vmem:[#allocation2 + $0x140] sm:$0xff]
    %v849 = vld [vmem:[#allocation2 + $0x148] sm:$0xff]
    %v850 = vld [vmem:[#allocation2 + $0x150] sm:$0xff]
    %v851 = vld [vmem:[#allocation2 + $0x158] sm:$0xff]
    %v852 = vld [vmem:[#allocation2 + $0x160] sm:$0xff]
    %v853 = vld [vmem:[#allocation2 + $0x168] sm:$0xff]
    %v854 = vld [vmem:[#allocation2 + $0x170] sm:$0xff]
    %v855 = vld [vmem:[#allocation2 + $0x178] sm:$0xff]
    %v856 = vld [vmem:[#allocation2 + $0x180] sm:$0xff]
    %v857 = vld [vmem:[#allocation2 + $0x188] sm:$0xff]
    %v858 = vld [vmem:[#allocation2 + $0x190] sm:$0xff]
    %v859 = vld [vmem:[#allocation2 + $0x198] sm:$0xff]
    %v860 = vld [vmem:[#allocation2 + $0x1a0] sm:$0xff]
    %v861 = vld [vmem:[#allocation2 + $0x1a8] sm:$0xff]
    %v862 = vld [vmem:[#allocation2 + $0x1b0] sm:$0xff]
    %v863 = vld [vmem:[#allocation2 + $0x1b8] sm:$0xff]
    %v864 = vld [vmem:[#allocation2 + $0x1c0] sm:$0xff]
    %v865 = vld [vmem:[#allocation2 + $0x1c8] sm:$0xff]
    %v866 = vld [vmem:[#allocation2 + $0x1d0] sm:$0xff]
    %v867 = vld [vmem:[#allocation2 + $0x1d8] sm:$0xff]
    %v868 = vld [vmem:[#allocation2 + $0x1e0] sm:$0xff]
    %v869 = vld [vmem:[#allocation2 + $0x1e8] sm:$0xff]
    %v870 = vld [vmem:[#allocation2 + $0x1f0] sm:$0xff]
    %v871 = vld [vmem:[#allocation2 + $0x1f8] sm:$0xff]
    %v872 = vld [vmem:[#allocation2 + $0x200] sm:$0xff]
    %v873 = vld [vmem:[#allocation2 + $0x208] sm:$0xff]
    %v874 = vld [vmem:[#allocation2 + $0x210] sm:$0xff]
    %v875 = vld [vmem:[#allocation2 + $0x218] sm:$0xff]
    %v876 = vld [vmem:[#allocation2 + $0x220] sm:$0xff]
    %v877 = vld [vmem:[#allocation2 + $0x228] sm:$0xff]
    %v878 = vld [vmem:[#allocation2 + $0x230] sm:$0xff]
    %v879 = vld [vmem:[#allocation2 + $0x238] sm:$0xff]
    %v880 = vld [vmem:[#allocation2 + $0x240] sm:$0xff]
    %v881 = vld [vmem:[#allocation2 + $0x248] sm:$0xff]
    %v882 = vld [vmem:[#allocation2 + $0x250] sm:$0xff]
    %v883 = vld [vmem:[#allocation2 + $0x258] sm:$0xff]
    %v884 = vld [vmem:[#allocation2 + $0x260] sm:$0xff]
    %v885 = vld [vmem:[#allocation2 + $0x268] sm:$0xff]
    %v886 = vld [vmem:[#allocation2 + $0x270] sm:$0xff]
    %v887 = vld [vmem:[#allocation2 + $0x278] sm:$0xff]
    %v888 = vld [vmem:[#allocation2 + $0x280] sm:$0xff]
    %v889 = vld [vmem:[#allocation2 + $0x288] sm:$0xff]
    %v890 = vld [vmem:[#allocation2 + $0x290] sm:$0xff]
    %v891 = vld [vmem:[#allocation2 + $0x298] sm:$0xff]
    %v892 = vld [vmem:[#allocation2 + $0x2a0] sm:$0xff]
    %v893 = vld [vmem:[#allocation2 + $0x2a8] sm:$0xff]
    %v894 = vld [vmem:[#allocation2 + $0x2b0] sm:$0xff]
    %v895 = vld [vmem:[#allocation2 + $0x2b8] sm:$0xff]
    %v896 = vld [vmem:[#allocation2 + $0x2c0] sm:$0xff]
    %v897 = vld [vmem:[#allocation2 + $0x2c8] sm:$0xff]
    %v898 = vld [vmem:[#allocation2 + $0x2d0] sm:$0xff]
    %v899 = vld [vmem:[#allocation2 + $0x2d8] sm:$0xff]
    %v900 = vld [vmem:[#allocation2 + $0x2e0] sm:$0xff]
    %v901 = vld [vmem:[#allocation2 + $0x2e8] sm:$0xff]
    %v902 = vld [vmem:[#allocation2 + $0x2f0] sm:$0xff]
    %v903 = vld [vmem:[#allocation2 + $0x2f8] sm:$0xff]
    %v904 = vld [vmem:[#allocation2 + $0x300] sm:$0xff]
    %v905 = vld [vmem:[#allocation2 + $0x308] sm:$0xff]
    %v906 = vld [vmem:[#allocation2 + $0x310] sm:$0xff]
    %v907 = vld [vmem:[#allocation2 + $0x318] sm:$0xff]
    %v908 = vld [vmem:[#allocation2 + $0x320] sm:$0xff]
    %v909 = vld [vmem:[#allocation2 + $0x328] sm:$0xff]
    %v910 = vld [vmem:[#allocation2 + $0x330] sm:$0xff]
    %v911 = vld [vmem:[#allocation2 + $0x338] sm:$0xff]
    %v912 = vld [vmem:[#allocation2 + $0x340] sm:$0xff]
    %v913 = vld [vmem:[#allocation2 + $0x348] sm:$0xff]
    %v914 = vld [vmem:[#allocation2 + $0x350] sm:$0xff]
    %v915 = vld [vmem:[#allocation2 + $0x358] sm:$0xff]
    %v916 = vld [vmem:[#allocation2 + $0x360] sm:$0xff]
    %v917 = vld [vmem:[#allocation2 + $0x368] sm:$0xff]
    %v918 = vld [vmem:[#allocation2 + $0x370] sm:$0xff]
    %v919 = vld [vmem:[#allocation2 + $0x378] sm:$0xff]
    %v920 = vld [vmem:[#allocation2 + $0x380] sm:$0xff]
    %v921 = vld [vmem:[#allocation2 + $0x388] sm:$0xff]
    %v922 = vld [vmem:[#allocation2 + $0x390] sm:$0xff]
    %v923 = vld [vmem:[#allocation2 + $0x398] sm:$0xff]
    %v924 = vld [vmem:[#allocation2 + $0x3a0] sm:$0xff]
    %v925 = vld [vmem:[#allocation2 + $0x3a8] sm:$0xff]
    %v926 = vld [vmem:[#allocation2 + $0x3b0] sm:$0xff]
    %v927 = vld [vmem:[#allocation2 + $0x3b8] sm:$0xff]
    %v928 = vld [vmem:[#allocation2 + $0x3c0] sm:$0xff]
    %v929 = vld [vmem:[#allocation2 + $0x3c8] sm:$0xff]
    %v930 = vld [vmem:[#allocation2 + $0x3d0] sm:$0xff]
    %v931 = vld [vmem:[#allocation2 + $0x3d8] sm:$0xff]
    %v932 = vld [vmem:[#allocation2 + $0x3e0] sm:$0xff]
    %v933 = vld [vmem:[#allocation2 + $0x3e8] sm:$0xff]
    %v934 = vld [vmem:[#allocation2 + $0x3f0] sm:$0xff]
    %v935 = vld [vmem:[#allocation2 + $0x3f8] sm:$0xff]
    %v936 = vld [vmem:[#allocation2 + $0x400] sm:$0xff]
    %v937 = vld [vmem:[#allocation2 + $0x408] sm:$0xff]
    %v938 = vld [vmem:[#allocation2 + $0x410] sm:$0xff]
    %v939 = vld [vmem:[#allocation2 + $0x418] sm:$0xff]
    %v940 = vld [vmem:[#allocation2 + $0x420] sm:$0xff]
    %v941 = vld [vmem:[#allocation2 + $0x428] sm:$0xff]
    %v942 = vld [vmem:[#allocation2 + $0x430] sm:$0xff]
    %v943 = vld [vmem:[#allocation2 + $0x438] sm:$0xff]
    %v944 = vld [vmem:[#allocation2 + $0x440] sm:$0xff]
    %v945 = vld [vmem:[#allocation2 + $0x448] sm:$0xff]
    %v946 = vld [vmem:[#allocation2 + $0x450] sm:$0xff]
    %v947 = vld [vmem:[#allocation2 + $0x458] sm:$0xff]
    %v948 = vld [vmem:[#allocation2 + $0x460] sm:$0xff]
    %v949 = vld [vmem:[#allocation2 + $0x468] sm:$0xff]
    %v950 = vld [vmem:[#allocation2 + $0x470] sm:$0xff]
    %v951 = vld [vmem:[#allocation2 + $0x478] sm:$0xff]
    %v952 = vld [vmem:[#allocation2 + $0x480] sm:$0xff]
    %v953 = vld [vmem:[#allocation2 + $0x488] sm:$0xff]
    %v954 = vld [vmem:[#allocation2 + $0x490] sm:$0xff]
    %v955 = vld [vmem:[#allocation2 + $0x498] sm:$0xff]
    %v956 = vld [vmem:[#allocation2 + $0x4a0] sm:$0xff]
    %v957 = vld [vmem:[#allocation2 + $0x4a8] sm:$0xff]
    %v958 = vld [vmem:[#allocation2 + $0x4b0] sm:$0xff]
    %v959 = vld [vmem:[#allocation2 + $0x4b8] sm:$0xff]
    %v960 = vld [vmem:[#allocation2 + $0x4c0] sm:$0xff]
    %v961 = vld [vmem:[#allocation2 + $0x4c8] sm:$0xff]
    %v962 = vld [vmem:[#allocation2 + $0x4d0] sm:$0xff]
    %v963 = vld [vmem:[#allocation2 + $0x4d8] sm:$0xff]
    %v964 = vld [vmem:[#allocation2 + $0x4e0] sm:$0xff]
    %v965 = vld [vmem:[#allocation2 + $0x4e8] sm:$0xff]
    %v966 = vld [vmem:[#allocation2 + $0x4f0] sm:$0xff]
    %v967 = vld [vmem:[#allocation2 + $0x4f8] sm:$0xff]
    %v968 = vld [vmem:[#allocation2 + $0x500] sm:$0xff]
    %v969 = vld [vmem:[#allocation2 + $0x508] sm:$0xff]
    %v970 = vld [vmem:[#allocation2 + $0x510] sm:$0xff]
    %v971 = vld [vmem:[#allocation2 + $0x518] sm:$0xff]
    %v972 = vld [vmem:[#allocation2 + $0x520] sm:$0xff]
    %v973 = vld [vmem:[#allocation2 + $0x528] sm:$0xff]
    %v974 = vld [vmem:[#allocation2 + $0x530] sm:$0xff]
    %v975 = vld [vmem:[#allocation2 + $0x538] sm:$0xff]
    %v976 = vld [vmem:[#allocation2 + $0x540] sm:$0xff]
    %v977 = vld [vmem:[#allocation2 + $0x548] sm:$0xff]
    %v978 = vld [vmem:[#allocation2 + $0x550] sm:$0xff]
    %v979 = vld [vmem:[#allocation2 + $0x558] sm:$0xff]
    %v980 = vld [vmem:[#allocation2 + $0x560] sm:$0xff]
    %v981 = vld [vmem:[#allocation2 + $0x568] sm:$0xff]
    %v982 = vld [vmem:[#allocation2 + $0x570] sm:$0xff]
    %v983 = vld [vmem:[#allocation2 + $0x578] sm:$0xff]
    %v984 = vld [vmem:[#allocation2 + $0x580] sm:$0xff]
    %v985 = vld [vmem:[#allocation2 + $0x588] sm:$0xff]
    %v986 = vld [vmem:[#allocation2 + $0x590] sm:$0xff]
    %v987 = vld [vmem:[#allocation2 + $0x598] sm:$0xff]
    %v988 = vld [vmem:[#allocation2 + $0x5a0] sm:$0xff]
    %v989 = vld [vmem:[#allocation2 + $0x5a8] sm:$0xff]
    %v990 = vld [vmem:[#allocation2 + $0x5b0] sm:$0xff]
    %v991 = vld [vmem:[#allocation2 + $0x5b8] sm:$0xff]
    %v992 = vld [vmem:[#allocation2 + $0x5c0] sm:$0xff]
    %v993 = vld [vmem:[#allocation2 + $0x5c8] sm:$0xff]
    %v994 = vld [vmem:[#allocation2 + $0x5d0] sm:$0xff]
    %v995 = vld [vmem:[#allocation2 + $0x5d8] sm:$0xff]
    %v996 = vld [vmem:[#allocation2 + $0x5e0] sm:$0xff]
    %v997 = vld [vmem:[#allocation2 + $0x5e8] sm:$0xff]
    %v998 = vld [vmem:[#allocation2 + $0x5f0] sm:$0xff]
    %v999 = vld [vmem:[#allocation2 + $0x5f8] sm:$0xff]
    %v1000 = vld [vmem:[#allocation2 + $0x600] sm:$0xff]
    %v1001 = vld [vmem:[#allocation2 + $0x608] sm:$0xff]
    %v1002 = vld [vmem:[#allocation2 + $0x610] sm:$0xff]
    %v1003 = vld [vmem:[#allocation2 + $0x618] sm:$0xff]
    %v1004 = vld [vmem:[#allocation2 + $0x620] sm:$0xff]
    %v1005 = vld [vmem:[#allocation2 + $0x628] sm:$0xff]
    %v1006 = vld [vmem:[#allocation2 + $0x630] sm:$0xff]
    %v1007 = vld [vmem:[#allocation2 + $0x638] sm:$0xff]
    %v1008 = vld [vmem:[#allocation2 + $0x640] sm:$0xff]
    %v1009 = vld [vmem:[#allocation2 + $0x648] sm:$0xff]
    %v1010 = vld [vmem:[#allocation2 + $0x650] sm:$0xff]
    %v1011 = vld [vmem:[#allocation2 + $0x658] sm:$0xff]
    %v1012 = vld [vmem:[#allocation2 + $0x660] sm:$0xff]
    %v1013 = vld [vmem:[#allocation2 + $0x668] sm:$0xff]
    %v1014 = vld [vmem:[#allocation2 + $0x670] sm:$0xff]
    %v1015 = vld [vmem:[#allocation2 + $0x678] sm:$0xff]
    %v1016 = vld [vmem:[#allocation2 + $0x680] sm:$0xff]
    %v1017 = vld [vmem:[#allocation2 + $0x688] sm:$0xff]
    %v1018 = vld [vmem:[#allocation2 + $0x690] sm:$0xff]
    %v1019 = vld [vmem:[#allocation2 + $0x698] sm:$0xff]
    %v1020 = vld [vmem:[#allocation2 + $0x6a0] sm:$0xff]
    %v1021 = vld [vmem:[#allocation2 + $0x6a8] sm:$0xff]
    %v1022 = vld [vmem:[#allocation2 + $0x6b0] sm:$0xff]
    %v1023 = vld [vmem:[#allocation2 + $0x6b8] sm:$0xff]
    %v1024 = vld [vmem:[#allocation2 + $0x6c0] sm:$0xff]
    %v1025 = vld [vmem:[#allocation2 + $0x6c8] sm:$0xff]
    %v1026 = vld [vmem:[#allocation2 + $0x6d0] sm:$0xff]
    %v1027 = vld [vmem:[#allocation2 + $0x6d8] sm:$0xff]
    %v1028 = vld [vmem:[#allocation2 + $0x6e0] sm:$0xff]
    %v1029 = vld [vmem:[#allocation2 + $0x6e8] sm:$0xff]
    %v1030 = vld [vmem:[#allocation2 + $0x6f0] sm:$0xff]
    %v1031 = vld [vmem:[#allocation2 + $0x6f8] sm:$0xff]
    %v1032 = vld [vmem:[#allocation2 + $0x700] sm:$0xff]
    %v1033 = vld [vmem:[#allocation2 + $0x708] sm:$0xff]
    %v1034 = vld [vmem:[#allocation2 + $0x710] sm:$0xff]
    %v1035 = vld [vmem:[#allocation2 + $0x718] sm:$0xff]
    %v1036 = vld [vmem:[#allocation2 + $0x720] sm:$0xff]
    %v1037 = vld [vmem:[#allocation2 + $0x728] sm:$0xff]
    %v1038 = vld [vmem:[#allocation2 + $0x730] sm:$0xff]
    %v1039 = vld [vmem:[#allocation2 + $0x738] sm:$0xff]
    %v1040 = vld [vmem:[#allocation2 + $0x740] sm:$0xff]
    %v1041 = vld [vmem:[#allocation2 + $0x748] sm:$0xff]
    %v1042 = vld [vmem:[#allocation2 + $0x750] sm:$0xff]
    %v1043 = vld [vmem:[#allocation2 + $0x758] sm:$0xff]
    %v1044 = vld [vmem:[#allocation2 + $0x760] sm:$0xff]
    %v1045 = vld [vmem:[#allocation2 + $0x768] sm:$0xff]
    %v1046 = vld [vmem:[#allocation2 + $0x770] sm:$0xff]
    %v1047 = vld [vmem:[#allocation2 + $0x778] sm:$0xff]
    %v1048 = vld [vmem:[#allocation2 + $0x780] sm:$0xff]
    %v1049 = vld [vmem:[#allocation2 + $0x788] sm:$0xff]
    %v1050 = vld [vmem:[#allocation2 + $0x790] sm:$0xff]
    %v1051 = vld [vmem:[#allocation2 + $0x798] sm:$0xff]
    %v1052 = vld [vmem:[#allocation2 + $0x7a0] sm:$0xff]
    %v1053 = vld [vmem:[#allocation2 + $0x7a8] sm:$0xff]
    %v1054 = vld [vmem:[#allocation2 + $0x7b0] sm:$0xff]
    %v1055 = vld [vmem:[#allocation2 + $0x7b8] sm:$0xff]
    %v1056 = vld [vmem:[#allocation2 + $0x7c0] sm:$0xff]
    %v1057 = vld [vmem:[#allocation2 + $0x7c8] sm:$0xff]
    %v1058 = vld [vmem:[#allocation2 + $0x7d0] sm:$0xff]
    %v1059 = vld [vmem:[#allocation2 + $0x7d8] sm:$0xff]
    %v1060 = vld [vmem:[#allocation2 + $0x7e0] sm:$0xff]
    %v1061 = vld [vmem:[#allocation2 + $0x7e8] sm:$0xff]
    %v1062 = vld [vmem:[#allocation2 + $0x7f0] sm:$0xff]
    %v1063 = vld [vmem:[#allocation2 + $0x7f8] sm:$0xff]
    %s1064 = sld [smem:[#allocation12 + $0x1]]
    %v1065 = vpack.c.bf16 %v796, %v796
    %v1066 = vpack.c.bf16 %v797, %v797
    %v1067 = vpack.c.bf16 %v798, %v798
    %v1068 = vpack.c.bf16 %v799, %v799
    %v1069 = vpack.c.bf16 %v800, %v800
    %v1070 = vpack.c.bf16 %v801, %v801
    %v1071 = vpack.c.bf16 %v802, %v802
    %v1072 = vpack.c.bf16 %v803, %v803
    %1073 = vmatprep.subr.bf16.mxu0 %v809
    %1074 = vmatpush1.bf16.msra.mxu0 %v808
    %1075 = vmatprep.subr.bf16.mxu0 %v813
    %1076 = vmatpush1.bf16.msra.mxu0 %v812
    %1077 = vmatprep.subr.bf16.mxu0 %v817
    %1078 = vmatpush1.bf16.msra.mxu0 %v816
    %1079 = vmatprep.subr.bf16.mxu0 %v821
    %1080 = vmatpush1.bf16.msra.mxu0 %v820
    %1081 = vmatprep.subr.bf16.mxu0 %v825
    %1082 = vmatpush1.bf16.msra.mxu0 %v824
    %1083 = vmatprep.subr.bf16.mxu0 %v829
    %1084 = vmatpush1.bf16.msra.mxu0 %v828
    %1085 = vmatprep.subr.bf16.mxu0 %v833
    %1086 = vmatpush1.bf16.msra.mxu0 %v832
    %1087 = vmatprep.subr.bf16.mxu0 %v837
    %1088 = vmatpush1.bf16.msra.mxu0 %v836
    %1089 = vmatprep.subr.bf16.mxu0 %v841
    %1090 = vmatpush1.bf16.msra.mxu0 %v840
    %1091 = vmatprep.subr.bf16.mxu0 %v845
    %1092 = vmatpush1.bf16.msra.mxu0 %v844
    %1093 = vmatprep.subr.bf16.mxu0 %v849
    %1094 = vmatpush1.bf16.msra.mxu0 %v848
    %1095 = vmatprep.subr.bf16.mxu0 %v853
    %1096 = vmatpush1.bf16.msra.mxu0 %v852
    %1097 = vmatprep.subr.bf16.mxu0 %v857
    %1098 = vmatpush1.bf16.msra.mxu0 %v856
    %1099 = vmatprep.subr.bf16.mxu0 %v861
    %1100 = vmatpush1.bf16.msra.mxu0 %v860
    %1101 = vmatprep.subr.bf16.mxu0 %v865
    %1102 = vmatpush1.bf16.msra.mxu0 %v864
    %1103 = vmatprep.subr.bf16.mxu0 %v869
    %1104 = vmatpush1.bf16.msra.mxu0 %v868
    %1105 = vmatprep.mubr.bf16.mxu0 %v1066
    %1106 = vmatmul.mubr.bf16.gmra.mrb[0].mxu0 %v1065
    %v1107 = vpop.f32.mrb[0].mxu0
    %v1108 = vadd.f32 0.0, %v1107
    %v1109 = vpop.f32.mrb[0].mxu0
    %v1110 = vadd.f32 0.0, %v1109
    %v1111 = vpop.f32.mrb[0].mxu0
    %v1112 = vpop.f32.mrb[0].mxu0
    %1113 = vdwg.mxu0
    %1114 = vmatprep.subr.bf16.mxu0 %v873
    %1115 = vmatpush1.bf16.msra.mxu0 %v872
    %1116 = vmatprep.subr.bf16.mxu0 %v877
    %1117 = vmatpush1.bf16.msra.mxu0 %v876
    %1118 = vmatprep.subr.bf16.mxu0 %v881
    %1119 = vmatpush1.bf16.msra.mxu0 %v880
    %1120 = vmatprep.subr.bf16.mxu0 %v885
    %1121 = vmatpush1.bf16.msra.mxu0 %v884
    %1122 = vmatprep.subr.bf16.mxu0 %v889
    %1123 = vmatpush1.bf16.msra.mxu0 %v888
    %1124 = vmatprep.subr.bf16.mxu0 %v893
    %1125 = vmatpush1.bf16.msra.mxu0 %v892
    %1126 = vmatprep.subr.bf16.mxu0 %v897
    %1127 = vmatpush1.bf16.msra.mxu0 %v896
    %1128 = vmatprep.subr.bf16.mxu0 %v901
    %1129 = vmatpush1.bf16.msra.mxu0 %v900
    %1130 = vmatprep.subr.bf16.mxu0 %v905
    %1131 = vmatpush1.bf16.msra.mxu0 %v904
    %1132 = vmatprep.subr.bf16.mxu0 %v909
    %1133 = vmatpush1.bf16.msra.mxu0 %v908
    %1134 = vmatprep.subr.bf16.mxu0 %v913
    %1135 = vmatpush1.bf16.msra.mxu0 %v912
    %1136 = vmatprep.subr.bf16.mxu0 %v917
    %1137 = vmatpush1.bf16.msra.mxu0 %v916
    %1138 = vmatprep.subr.bf16.mxu0 %v921
    %1139 = vmatpush1.bf16.msra.mxu0 %v920
    %1140 = vmatprep.subr.bf16.mxu0 %v925
    %1141 = vmatpush1.bf16.msra.mxu0 %v924
    %1142 = vmatprep.subr.bf16.mxu0 %v929
    %1143 = vmatpush1.bf16.msra.mxu0 %v928
    %1144 = vmatprep.subr.bf16.mxu0 %v933
    %1145 = vmatpush1.bf16.msra.mxu0 %v932
    %1146 = vmatprep.mubr.bf16.mxu0 %v1068
    %1147 = vmatmul.mubr.bf16.gmra.mrb[0].mxu0 %v1067
    %v1148 = vpop.f32.mrb[0].mxu0
    %v1149 = vadd.f32 %v1108, %v1148
    %v1150 = vpop.f32.mrb[0].mxu0
    %v1151 = vadd.f32 %v1110, %v1150
    %v1152 = vpop.f32.mrb[0].mxu0
    %v1153 = vpop.f32.mrb[0].mxu0
    %1154 = vdwg.mxu0
    %1155 = vmatprep.subr.bf16.mxu0 %v937
    %1156 = vmatpush1.bf16.msra.mxu0 %v936
    %1157 = vmatprep.subr.bf16.mxu0 %v941
    %1158 = vmatpush1.bf16.msra.mxu0 %v940
    %1159 = vmatprep.subr.bf16.mxu0 %v945
    %1160 = vmatpush1.bf16.msra.mxu0 %v944
    %1161 = vmatprep.subr.bf16.mxu0 %v949
    %1162 = vmatpush1.bf16.msra.mxu0 %v948
    %1163 = vmatprep.subr.bf16.mxu0 %v953
    %1164 = vmatpush1.bf16.msra.mxu0 %v952
    %1165 = vmatprep.subr.bf16.mxu0 %v957
    %1166 = vmatpush1.bf16.msra.mxu0 %v956
    %1167 = vmatprep.subr.bf16.mxu0 %v961
    %1168 = vmatpush1.bf16.msra.mxu0 %v960
    %1169 = vmatprep.subr.bf16.mxu0 %v965
    %1170 = vmatpush1.bf16.msra.mxu0 %v964
    %1171 = vmatprep.subr.bf16.mxu0 %v969
    %1172 = vmatpush1.bf16.msra.mxu0 %v968
    %1173 = vmatprep.subr.bf16.mxu0 %v973
    %1174 = vmatpush1.bf16.msra.mxu0 %v972
    %1175 = vmatprep.subr.bf16.mxu0 %v977
    %1176 = vmatpush1.bf16.msra.mxu0 %v976
    %1177 = vmatprep.subr.bf16.mxu0 %v981
    %1178 = vmatpush1.bf16.msra.mxu0 %v980
    %1179 = vmatprep.subr.bf16.mxu0 %v985
    %1180 = vmatpush1.bf16.msra.mxu0 %v984
    %1181 = vmatprep.subr.bf16.mxu0 %v989
    %1182 = vmatpush1.bf16.msra.mxu0 %v988
    %1183 = vmatprep.subr.bf16.mxu0 %v993
    %1184 = vmatpush1.bf16.msra.mxu0 %v992
    %1185 = vmatprep.subr.bf16.mxu0 %v997
    %1186 = vmatpush1.bf16.msra.mxu0 %v996
    %1187 = vmatprep.mubr.bf16.mxu0 %v1070
    %1188 = vmatmul.mubr.bf16.gmra.mrb[0].mxu0 %v1069
    %v1189 = vpop.f32.mrb[0].mxu0
    %v1190 = vadd.f32 %v1149, %v1189
    %v1191 = vpop.f32.mrb[0].mxu0
    %v1192 = vadd.f32 %v1151, %v1191
    %v1193 = vpop.f32.mrb[0].mxu0
    %v1194 = vpop.f32.mrb[0].mxu0
    %1195 = vdwg.mxu0
    %1196 = vmatprep.subr.bf16.mxu0 %v1001
    %1197 = vmatpush1.bf16.msra.mxu0 %v1000
    %1198 = vmatprep.subr.bf16.mxu0 %v1005
    %1199 = vmatpush1.bf16.msra.mxu0 %v1004
    %1200 = vmatprep.subr.bf16.mxu0 %v1009
    %1201 = vmatpush1.bf16.msra.mxu0 %v1008
    %1202 = vmatprep.subr.bf16.mxu0 %v1013
    %1203 = vmatpush1.bf16.msra.mxu0 %v1012
    %1204 = vmatprep.subr.bf16.mxu0 %v1017
    %1205 = vmatpush1.bf16.msra.mxu0 %v1016
    %1206 = vmatprep.subr.bf16.mxu0 %v1021
    %1207 = vmatpush1.bf16.msra.mxu0 %v1020
    %1208 = vmatprep.subr.bf16.mxu0 %v1025
    %1209 = vmatpush1.bf16.msra.mxu0 %v1024
    %1210 = vmatprep.subr.bf16.mxu0 %v1029
    %1211 = vmatpush1.bf16.msra.mxu0 %v1028
    %1212 = vmatprep.subr.bf16.mxu0 %v1033
    %1213 = vmatpush1.bf16.msra.mxu0 %v1032
    %1214 = vmatprep.subr.bf16.mxu0 %v1037
    %1215 = vmatpush1.bf16.msra.mxu0 %v1036
    %1216 = vmatprep.subr.bf16.mxu0 %v1041
    %1217 = vmatpush1.bf16.msra.mxu0 %v1040
    %1218 = vmatprep.subr.bf16.mxu0 %v1045
    %1219 = vmatpush1.bf16.msra.mxu0 %v1044
    %1220 = vmatprep.subr.bf16.mxu0 %v1049
    %1221 = vmatpush1.bf16.msra.mxu0 %v1048
    %1222 = vmatprep.subr.bf16.mxu0 %v1053
    %1223 = vmatpush1.bf16.msra.mxu0 %v1052
    %1224 = vmatprep.subr.bf16.mxu0 %v1057
    %1225 = vmatpush1.bf16.msra.mxu0 %v1056
    %1226 = vmatprep.subr.bf16.mxu0 %v1061
    %1227 = vmatpush1.bf16.msra.mxu0 %v1060
    %1228 = vmatprep.mubr.bf16.mxu0 %v1072
    %1229 = vmatmul.mubr.bf16.gmra.mrb[0].mxu0 %v1071
    %v1230 = vpop.f32.mrb[0].mxu0
    %v1231 = vadd.f32 %v1190, %v1230
    %v1232 = vpop.f32.mrb[0].mxu0
    %v1233 = vadd.f32 %v1192, %v1232
    %v1234 = vpop.f32.mrb[0].mxu0
    %v1235 = vpop.f32.mrb[0].mxu0
    %1236 = vdwg.mxu0
    %1237 = vmatprep.subr.bf16.mxu0 %v811
    %1238 = vmatpush1.bf16.msra.mxu0 %v810
    %1239 = vmatprep.subr.bf16.mxu0 %v815
    %1240 = vmatpush1.bf16.msra.mxu0 %v814
    %1241 = vmatprep.subr.bf16.mxu0 %v819
    %1242 = vmatpush1.bf16.msra.mxu0 %v818
    %1243 = vmatprep.subr.bf16.mxu0 %v823
    %1244 = vmatpush1.bf16.msra.mxu0 %v822
    %1245 = vmatprep.subr.bf16.mxu0 %v827
    %1246 = vmatpush1.bf16.msra.mxu0 %v826
    %1247 = vmatprep.subr.bf16.mxu0 %v831
    %1248 = vmatpush1.bf16.msra.mxu0 %v830
    %1249 = vmatprep.subr.bf16.mxu0 %v835
    %1250 = vmatpush1.bf16.msra.mxu0 %v834
    %1251 = vmatprep.subr.bf16.mxu0 %v839
    %1252 = vmatpush1.bf16.msra.mxu0 %v838
    %1253 = vmatprep.subr.bf16.mxu0 %v843
    %1254 = vmatpush1.bf16.msra.mxu0 %v842
    %1255 = vmatprep.subr.bf16.mxu0 %v847
    %1256 = vmatpush1.bf16.msra.mxu0 %v846
    %1257 = vmatprep.subr.bf16.mxu0 %v851
    %1258 = vmatpush1.bf16.msra.mxu0 %v850
    %1259 = vmatprep.subr.bf16.mxu0 %v855
    %1260 = vmatpush1.bf16.msra.mxu0 %v854
    %1261 = vmatprep.subr.bf16.mxu0 %v859
    %1262 = vmatpush1.bf16.msra.mxu0 %v858
    %1263 = vmatprep.subr.bf16.mxu0 %v863
    %1264 = vmatpush1.bf16.msra.mxu0 %v862
    %1265 = vmatprep.subr.bf16.mxu0 %v867
    %1266 = vmatpush1.bf16.msra.mxu0 %v866
    %1267 = vmatprep.subr.bf16.mxu0 %v871
    %1268 = vmatpush1.bf16.msra.mxu0 %v870
    %1269 = vmatprep.mubr.bf16.mxu0 %v1066
    %1270 = vmatmul.mubr.bf16.gmra.mrb[0].mxu0 %v1065
    %v1271 = vpop.f32.mrb[0].mxu0
    %v1272 = vadd.f32 0.0, %v1271
    %v1273 = vpop.f32.mrb[0].mxu0
    %v1274 = vadd.f32 0.0, %v1273
    %v1275 = vpop.f32.mrb[0].mxu0
    %v1276 = vpop.f32.mrb[0].mxu0
    %1277 = vdwg.mxu0
    %1278 = vmatprep.subr.bf16.mxu0 %v875
    %1279 = vmatpush1.bf16.msra.mxu0 %v874
    %1280 = vmatprep.subr.bf16.mxu0 %v879
    %1281 = vmatpush1.bf16.msra.mxu0 %v878
    %1282 = vmatprep.subr.bf16.mxu0 %v883
    %1283 = vmatpush1.bf16.msra.mxu0 %v882
    %1284 = vmatprep.subr.bf16.mxu0 %v887
    %1285 = vmatpush1.bf16.msra.mxu0 %v886
    %1286 = vmatprep.subr.bf16.mxu0 %v891
    %1287 = vmatpush1.bf16.msra.mxu0 %v890
    %1288 = vmatprep.subr.bf16.mxu0 %v895
    %1289 = vmatpush1.bf16.msra.mxu0 %v894
    %1290 = vmatprep.subr.bf16.mxu0 %v899
    %1291 = vmatpush1.bf16.msra.mxu0 %v898
    %1292 = vmatprep.subr.bf16.mxu0 %v903
    %1293 = vmatpush1.bf16.msra.mxu0 %v902
    %1294 = vmatprep.subr.bf16.mxu0 %v907
    %1295 = vmatpush1.bf16.msra.mxu0 %v906
    %1296 = vmatprep.subr.bf16.mxu0 %v911
    %1297 = vmatpush1.bf16.msra.mxu0 %v910
    %1298 = vmatprep.subr.bf16.mxu0 %v915
    %1299 = vmatpush1.bf16.msra.mxu0 %v914
    %1300 = vmatprep.subr.bf16.mxu0 %v919
    %1301 = vmatpush1.bf16.msra.mxu0 %v918
    %1302 = vmatprep.subr.bf16.mxu0 %v923
    %1303 = vmatpush1.bf16.msra.mxu0 %v922
    %1304 = vmatprep.subr.bf16.mxu0 %v927
    %1305 = vmatpush1.bf16.msra.mxu0 %v926
    %1306 = vmatprep.subr.bf16.mxu0 %v931
    %1307 = vmatpush1.bf16.msra.mxu0 %v930
    %1308 = vmatprep.subr.bf16.mxu0 %v935
    %1309 = vmatpush1.bf16.msra.mxu0 %v934
    %1310 = vmatprep.mubr.bf16.mxu0 %v1068
    %1311 = vmatmul.mubr.bf16.gmra.mrb[0].mxu0 %v1067
    %v1312 = vpop.f32.mrb[0].mxu0
    %v1313 = vadd.f32 %v1272, %v1312
    %v1314 = vpop.f32.mrb[0].mxu0
    %v1315 = vadd.f32 %v1274, %v1314
    %v1316 = vpop.f32.mrb[0].mxu0
    %v1317 = vpop.f32.mrb[0].mxu0
    %1318 = vdwg.mxu0
    %1319 = vmatprep.subr.bf16.mxu0 %v939
    %1320 = vmatpush1.bf16.msra.mxu0 %v938
    %1321 = vmatprep.subr.bf16.mxu0 %v943
    %1322 = vmatpush1.bf16.msra.mxu0 %v942
    %1323 = vmatprep.subr.bf16.mxu0 %v947
    %1324 = vmatpush1.bf16.msra.mxu0 %v946
    %1325 = vmatprep.subr.bf16.mxu0 %v951
    %1326 = vmatpush1.bf16.msra.mxu0 %v950
    %1327 = vmatprep.subr.bf16.mxu0 %v955
    %1328 = vmatpush1.bf16.msra.mxu0 %v954
    %1329 = vmatprep.subr.bf16.mxu0 %v959
    %1330 = vmatpush1.bf16.msra.mxu0 %v958
    %1331 = vmatprep.subr.bf16.mxu0 %v963
    %1332 = vmatpush1.bf16.msra.mxu0 %v962
    %1333 = vmatprep.subr.bf16.mxu0 %v967
    %1334 = vmatpush1.bf16.msra.mxu0 %v966
    %1335 = vmatprep.subr.bf16.mxu0 %v971
    %1336 = vmatpush1.bf16.msra.mxu0 %v970
    %1337 = vmatprep.subr.bf16.mxu0 %v975
    %1338 = vmatpush1.bf16.msra.mxu0 %v974
    %1339 = vmatprep.subr.bf16.mxu0 %v979
    %1340 = vmatpush1.bf16.msra.mxu0 %v978
    %1341 = vmatprep.subr.bf16.mxu0 %v983
    %1342 = vmatpush1.bf16.msra.mxu0 %v982
    %1343 = vmatprep.subr.bf16.mxu0 %v987
    %1344 = vmatpush1.bf16.msra.mxu0 %v986
    %1345 = vmatprep.subr.bf16.mxu0 %v991
    %1346 = vmatpush1.bf16.msra.mxu0 %v990
    %1347 = vmatprep.subr.bf16.mxu0 %v995
    %1348 = vmatpush1.bf16.msra.mxu0 %v994
    %1349 = vmatprep.subr.bf16.mxu0 %v999
    %1350 = vmatpush1.bf16.msra.mxu0 %v998
    %1351 = vmatprep.mubr.bf16.mxu0 %v1070
    %1352 = vmatmul.mubr.bf16.gmra.mrb[0].mxu0 %v1069
    %v1353 = vpop.f32.mrb[0].mxu0
    %v1354 = vadd.f32 %v1313, %v1353
    %v1355 = vpop.f32.mrb[0].mxu0
    %v1356 = vadd.f32 %v1315, %v1355
    %v1357 = vpop.f32.mrb[0].mxu0
    %v1358 = vpop.f32.mrb[0].mxu0
    %1359 = vdwg.mxu0
    %1360 = vmatprep.subr.bf16.mxu0 %v1003
    %1361 = vmatpush1.bf16.msra.mxu0 %v1002
    %1362 = vmatprep.subr.bf16.mxu0 %v1007
    %1363 = vmatpush1.bf16.msra.mxu0 %v1006
    %1364 = vmatprep.subr.bf16.mxu0 %v1011
    %1365 = vmatpush1.bf16.msra.mxu0 %v1010
    %1366 = vmatprep.subr.bf16.mxu0 %v1015
    %1367 = vmatpush1.bf16.msra.mxu0 %v1014
    %1368 = vmatprep.subr.bf16.mxu0 %v1019
    %1369 = vmatpush1.bf16.msra.mxu0 %v1018
    %1370 = vmatprep.subr.bf16.mxu0 %v1023
    %1371 = vmatpush1.bf16.msra.mxu0 %v1022
    %1372 = vmatprep.subr.bf16.mxu0 %v1027
    %1373 = vmatpush1.bf16.msra.mxu0 %v1026
    %1374 = vmatprep.subr.bf16.mxu0 %v1031
    %1375 = vmatpush1.bf16.msra.mxu0 %v1030
    %1376 = vmatprep.subr.bf16.mxu0 %v1035
    %1377 = vmatpush1.bf16.msra.mxu0 %v1034
    %1378 = vmatprep.subr.bf16.mxu0 %v1039
    %1379 = vmatpush1.bf16.msra.mxu0 %v1038
    %1380 = vmatprep.subr.bf16.mxu0 %v1043
    %1381 = vmatpush1.bf16.msra.mxu0 %v1042
    %1382 = vmatprep.subr.bf16.mxu0 %v1047
    %1383 = vmatpush1.bf16.msra.mxu0 %v1046
    %1384 = vmatprep.subr.bf16.mxu0 %v1051
    %1385 = vmatpush1.bf16.msra.mxu0 %v1050
    %1386 = vmatprep.subr.bf16.mxu0 %v1055
    %1387 = vmatpush1.bf16.msra.mxu0 %v1054
    %1388 = vmatprep.subr.bf16.mxu0 %v1059
    %1389 = vmatpush1.bf16.msra.mxu0 %v1058
    %1390 = vmatprep.subr.bf16.mxu0 %v1063
    %1391 = vmatpush1.bf16.msra.mxu0 %v1062
    %1392 = vmatprep.mubr.bf16.mxu0 %v1072
    %1393 = vmatmul.mubr.bf16.gmra.mrb[0].mxu0 %v1071
    %v1394 = vpop.f32.mrb[0].mxu0
    %v1395 = vadd.f32 %v1354, %v1394
    %v1396 = vpop.f32.mrb[0].mxu0
    %v1397 = vadd.f32 %v1356, %v1396
    %v1398 = vpop.f32.mrb[0].mxu0
    %v1399 = vpop.f32.mrb[0].mxu0
    %1400 = vdwg.mxu0
    %v1401 = vrot.slane %v1231, 4
    %v1402 = vadd.f32 %v1231, %v1401
    %v1403 = vrot.slane %v1402, 2
    %v1404 = vadd.f32 %v1402, %v1403
    %v1405 = vrot.slane %v1404, 1
    %v1406 = vadd.f32 %v1404, %v1405
    %v1407 = vrot.slane %v1233, 4
    %v1408 = vadd.f32 %v1233, %v1407
    %v1409 = vrot.slane %v1408, 2
    %v1410 = vadd.f32 %v1408, %v1409
    %v1411 = vrot.slane %v1410, 1
    %v1412 = vadd.f32 %v1410, %v1411
    %v1413 = vrot.slane %v1395, 4
    %v1414 = vadd.f32 %v1395, %v1413
    %v1415 = vrot.slane %v1414, 2
    %v1416 = vadd.f32 %v1414, %v1415
    %v1417 = vrot.slane %v1416, 1
    %v1418 = vadd.f32 %v1416, %v1417
    %v1419 = vrot.slane %v1397, 4
    %v1420 = vadd.f32 %v1397, %v1419
    %v1421 = vrot.slane %v1420, 2
    %v1422 = vadd.f32 %v1420, %v1421
    %v1423 = vrot.slane %v1422, 1
    %v1424 = vadd.f32 %v1422, %v1423
    %v1425 = vmul.f32 %v1406, %v439
    %v1426 = vmul.f32 %v1412, %v439
    %v1427 = vmul.f32 %v1418, %v439
    %v1428 = vmul.f32 %v1424, %v439
    %v1429 = vmul.f32 %v1231, %v1231
    %v1430 = vmul.f32 %v1233, %v1233
    %v1431 = vmul.f32 %v1395, %v1395
    %v1432 = vmul.f32 %v1397, %v1397
    %v1433 = vrot.slane %v1429, 4
    %v1434 = vadd.f32 %v1429, %v1433
    %v1435 = vrot.slane %v1434, 2
    %v1436 = vadd.f32 %v1434, %v1435
    %v1437 = vrot.slane %v1436, 1
    %v1438 = vadd.f32 %v1436, %v1437
    %v1439 = vrot.slane %v1430, 4
    %v1440 = vadd.f32 %v1430, %v1439
    %v1441 = vrot.slane %v1440, 2
    %v1442 = vadd.f32 %v1440, %v1441
    %v1443 = vrot.slane %v1442, 1
    %v1444 = vadd.f32 %v1442, %v1443
    %v1445 = vrot.slane %v1431, 4
    %v1446 = vadd.f32 %v1431, %v1445
    %v1447 = vrot.slane %v1446, 2
    %v1448 = vadd.f32 %v1446, %v1447
    %v1449 = vrot.slane %v1448, 1
    %v1450 = vadd.f32 %v1448, %v1449
    %v1451 = vrot.slane %v1432, 4
    %v1452 = vadd.f32 %v1432, %v1451
    %v1453 = vrot.slane %v1452, 2
    %v1454 = vadd.f32 %v1452, %v1453
    %v1455 = vrot.slane %v1454, 1
    %v1456 = vadd.f32 %v1454, %v1455
    %v1457 = vmul.f32 %v1438, %v439
    %v1458 = vmul.f32 %v1444, %v439
    %v1459 = vmul.f32 %v1450, %v439
    %v1460 = vmul.f32 %v1456, %v439
    %v1461 = vmul.f32 %v1425, %v1425
    %v1462 = vmul.f32 %v1426, %v1426
    %v1463 = vmul.f32 %v1427, %v1427
    %v1464 = vmul.f32 %v1428, %v1428
    %v1465 = vsub.f32 %v1457, %v1461
    %v1466 = vsub.f32 %v1458, %v1462
    %v1467 = vsub.f32 %v1459, %v1463
    %v1468 = vsub.f32 %v1460, %v1464
    %v1469 = vmax.f32 %v1465, 0.0
    %v1470 = vmax.f32 %v1466, 0.0
    %v1471 = vmax.f32 %v1467, 0.0
    %v1472 = vmax.f32 %v1468, 0.0
    %v1473 = vld [vmem:[%s4] ss:$2 sm:$0xf]
    %s1474 = scalar_lea.vmem %s4, 1
    %v1475 = vld [vmem:[%s1474] ss:$2 sm:$0xf]
    %v1476 = vadd.f32 %v1469, 1e-05
    %v1477 = vadd.f32 %v1470, 1e-05
    %v1478 = vadd.f32 %v1471, 1e-05
    %v1479 = vadd.f32 %v1472, 1e-05
    %v1480 = vrsqrt.pop %v1476
    %v1481 = vrsqrt.pop %v1477
    %v1482 = vrsqrt.pop %v1478
    %v1483 = vrsqrt.pop %v1479
    %v1488 = vcombine.low %v1480, %v1481
    %v1489 = vcombine.low %v1482, %v1483
    %v1491 = vunpack.c.l.s4 1966171168
    %v1492 = vunpack.c.0.s8 %v1491
    %v1493 = vlaneseq
    %v1494 = vshrl.u32 %v1493, 7
    %v1495 = vsub.s32 %v1492, %v1494
    %v1496 = vrot.slane %v1488, %v1495
    %v1498 = vunpack.c.l.s4 1966171168
    %v1499 = vunpack.c.0.s8 %v1498
    %v1500 = vlaneseq
    %v1501 = vshrl.u32 %v1500, 7
    %v1502 = vsub.s32 %v1499, %v1501
    %v1503 = vrot.slane %v1489, %v1502
    %v1504 = vcombine.low %v1496, %v1503
    %v1506 = vunpack.c.l.s4 1966171168
    %v1507 = vunpack.c.0.s8 %v1506
    %v1508 = vlaneseq
    %v1509 = vshrl.u32 %v1508, 7
    %v1510 = vsub.s32 %v1507, %v1509
    %v1511 = vrot.slane %v1504, %v1510
    %v1513 = vmul.f32 %v1473, %v1511
    %v1515 = vlaneseq
    %v1516 = vshrl.u32 %v1515, 7
    %v1517 = vsub.s32 0, %v1516
    %v1518 = vrot.slane %v1513, %v1517
    %v1519 = vlaneseq
    %v1520 = vshrl.u32 %v1519, 7
    %v1521 = vsub.s32 1, %v1520
    %v1522 = vrot.slane %v1513, %v1521
    %v1523 = vlaneseq
    %v1524 = vshrl.u32 %v1523, 7
    %v1525 = vsub.s32 2, %v1524
    %v1526 = vrot.slane %v1513, %v1525
    %v1527 = vlaneseq
    %v1528 = vshrl.u32 %v1527, 7
    %v1529 = vsub.s32 3, %v1528
    %v1530 = vrot.slane %v1513, %v1529
    %v1535 = vmul.f32 %v1231, %v1518
    %v1536 = vmul.f32 %v1233, %v1522
    %v1537 = vmul.f32 %v1395, %v1526
    %v1538 = vmul.f32 %v1397, %v1530
    %v1539 = vmul.f32 %v1425, %v1518
    %v1540 = vmul.f32 %v1426, %v1522
    %v1541 = vmul.f32 %v1427, %v1526
    %v1542 = vmul.f32 %v1428, %v1530
    %v1547 = vcombine.low %v1539, %v1540
    %v1548 = vcombine.low %v1541, %v1542
    %v1550 = vunpack.c.l.s4 1966171168
    %v1551 = vunpack.c.0.s8 %v1550
    %v1552 = vlaneseq
    %v1553 = vshrl.u32 %v1552, 7
    %v1554 = vsub.s32 %v1551, %v1553
    %v1555 = vrot.slane %v1547, %v1554
    %v1557 = vunpack.c.l.s4 1966171168
    %v1558 = vunpack.c.0.s8 %v1557
    %v1559 = vlaneseq
    %v1560 = vshrl.u32 %v1559, 7
    %v1561 = vsub.s32 %v1558, %v1560
    %v1562 = vrot.slane %v1548, %v1561
    %v1563 = vcombine.low %v1555, %v1562
    %v1565 = vunpack.c.l.s4 1966171168
    %v1566 = vunpack.c.0.s8 %v1565
    %v1567 = vlaneseq
    %v1568 = vshrl.u32 %v1567, 7
    %v1569 = vsub.s32 %v1566, %v1568
    %v1570 = vrot.slane %v1563, %v1569
    %v1572 = vsub.f32 %v1475, %v1570
    %v1574 = vlaneseq
    %v1575 = vshrl.u32 %v1574, 7
    %v1576 = vsub.s32 0, %v1575
    %v1577 = vrot.slane %v1572, %v1576
    %v1578 = vlaneseq
    %v1579 = vshrl.u32 %v1578, 7
    %v1580 = vsub.s32 1, %v1579
    %v1581 = vrot.slane %v1572, %v1580
    %v1582 = vlaneseq
    %v1583 = vshrl.u32 %v1582, 7
    %v1584 = vsub.s32 2, %v1583
    %v1585 = vrot.slane %v1572, %v1584
    %v1586 = vlaneseq
    %v1587 = vshrl.u32 %v1586, 7
    %v1588 = vsub.s32 3, %v1587
    %v1589 = vrot.slane %v1572, %v1588
    %v1594 = vadd.f32 %v1535, %v1577
    %v1595 = vadd.f32 %v1536, %v1581
    %v1596 = vadd.f32 %v1537, %v1585
    %v1597 = vadd.f32 %v1538, %v1589
    %vm1598 = vcmp.ge.f32.partialorder %v1594, 0.0
    %vm1599 = vcmp.ge.f32.partialorder %v1595, 0.0
    %vm1600 = vcmp.ge.f32.partialorder %v1596, 0.0
    %vm1601 = vcmp.ge.f32.partialorder %v1597, 0.0
    %v1602 = vstv %s1064
    %v1603 = vmul.f32 %v1602, %v1594
    %v1604 = vmul.f32 %v1602, %v1595
    %v1605 = vmul.f32 %v1602, %v1596
    %v1606 = vmul.f32 %v1602, %v1597
    %v1607 = vsel %vm1598, %v1594, %v1603
    %v1608 = vsel %vm1599, %v1595, %v1604
    %v1609 = vsel %vm1600, %v1596, %v1605
    %v1610 = vsel %vm1601, %v1597, %v1606
    %s1611 = smul.u32 4, 64
    %s1612 = smul.u32 %s1611, 1
    %s1613 = sshll.u32 %s1612, 4
    %1614 = dma.done %s112, %s1613
    %v1615 = vld [vmem:[#allocation3] sm:$0xff]
    %v1616 = vld [vmem:[#allocation3 + $0x8] sm:$0xff]
    %v1617 = vld [vmem:[#allocation3 + $0x10] sm:$0xff]
    %v1618 = vld [vmem:[#allocation3 + $0x18] sm:$0xff]
    %v1619 = vld [vmem:[#allocation3 + $0x20] sm:$0xff]
    %v1620 = vld [vmem:[#allocation3 + $0x28] sm:$0xff]
    %v1621 = vld [vmem:[#allocation3 + $0x30] sm:$0xff]
    %v1622 = vld [vmem:[#allocation3 + $0x38] sm:$0xff]
    %v1623 = vld [vmem:[#allocation3 + $0x40] sm:$0xff]
    %v1624 = vld [vmem:[#allocation3 + $0x48] sm:$0xff]
    %v1625 = vld [vmem:[#allocation3 + $0x50] sm:$0xff]
    %v1626 = vld [vmem:[#allocation3 + $0x58] sm:$0xff]
    %v1627 = vld [vmem:[#allocation3 + $0x60] sm:$0xff]
    %v1628 = vld [vmem:[#allocation3 + $0x68] sm:$0xff]
    %v1629 = vld [vmem:[#allocation3 + $0x70] sm:$0xff]
    %v1630 = vld [vmem:[#allocation3 + $0x78] sm:$0xff]
    %v1631 = vld [vmem:[#allocation3 + $0x80] sm:$0xff]
    %v1632 = vld [vmem:[#allocation3 + $0x88] sm:$0xff]
    %v1633 = vld [vmem:[#allocation3 + $0x90] sm:$0xff]
    %v1634 = vld [vmem:[#allocation3 + $0x98] sm:$0xff]
    %v1635 = vld [vmem:[#allocation3 + $0xa0] sm:$0xff]
    %v1636 = vld [vmem:[#allocation3 + $0xa8] sm:$0xff]
    %v1637 = vld [vmem:[#allocation3 + $0xb0] sm:$0xff]
    %v1638 = vld [vmem:[#allocation3 + $0xb8] sm:$0xff]
    %v1639 = vld [vmem:[#allocation3 + $0xc0] sm:$0xff]
    %v1640 = vld [vmem:[#allocation3 + $0xc8] sm:$0xff]
    %v1641 = vld [vmem:[#allocation3 + $0xd0] sm:$0xff]
    %v1642 = vld [vmem:[#allocation3 + $0xd8] sm:$0xff]
    %v1643 = vld [vmem:[#allocation3 + $0xe0] sm:$0xff]
    %v1644 = vld [vmem:[#allocation3 + $0xe8] sm:$0xff]
    %v1645 = vld [vmem:[#allocation3 + $0xf0] sm:$0xff]
    %v1646 = vld [vmem:[#allocation3 + $0xf8] sm:$0xff]
    %s1647 = sld [smem:[#allocation12 + $0x2]]
    %v1648 = vpack.c.bf16 %v1607, %v1607
    %v1649 = vpack.c.bf16 %v1608, %v1608
    %v1650 = vpack.c.bf16 %v1609, %v1609
    %v1651 = vpack.c.bf16 %v1610, %v1610
    %1652 = vmatprep.subr.bf16.mxu0 0
    %1653 = vmatpush1.bf16.msra.mxu0 %v1615
    %1654 = vmatprep.subr.bf16.mxu0 0
    %1655 = vmatpush1.bf16.msra.mxu0 %v1616
    %1656 = vmatprep.subr.bf16.mxu0 0
    %1657 = vmatpush1.bf16.msra.mxu0 %v1617
    %1658 = vmatprep.subr.bf16.mxu0 0
    %1659 = vmatpush1.bf16.msra.mxu0 %v1618
    %1660 = vmatprep.subr.bf16.mxu0 0
    %1661 = vmatpush1.bf16.msra.mxu0 %v1619
    %1662 = vmatprep.subr.bf16.mxu0 0
    %1663 = vmatpush1.bf16.msra.mxu0 %v1620
    %1664 = vmatprep.subr.bf16.mxu0 0
    %1665 = vmatpush1.bf16.msra.mxu0 %v1621
    %1666 = vmatprep.subr.bf16.mxu0 0
    %1667 = vmatpush1.bf16.msra.mxu0 %v1622
    %1668 = vmatprep.subr.bf16.mxu0 0
    %1669 = vmatpush1.bf16.msra.mxu0 %v1623
    %1670 = vmatprep.subr.bf16.mxu0 0
    %1671 = vmatpush1.bf16.msra.mxu0 %v1624
    %1672 = vmatprep.subr.bf16.mxu0 0
    %1673 = vmatpush1.bf16.msra.mxu0 %v1625
    %1674 = vmatprep.subr.bf16.mxu0 0
    %1675 = vmatpush1.bf16.msra.mxu0 %v1626
    %1676 = vmatprep.subr.bf16.mxu0 0
    %1677 = vmatpush1.bf16.msra.mxu0 %v1627
    %1678 = vmatprep.subr.bf16.mxu0 0
    %1679 = vmatpush1.bf16.msra.mxu0 %v1628
    %1680 = vmatprep.subr.bf16.mxu0 0
    %1681 = vmatpush1.bf16.msra.mxu0 %v1629
    %1682 = vmatprep.subr.bf16.mxu0 0
    %1683 = vmatpush1.bf16.msra.mxu0 %v1630
    %1684 = vmatprep.mubr.bf16.mxu0 %v1649
    %1685 = vmatmul.mubr.bf16.gmra.mrb[0].mxu0 %v1648
    %v1686 = vpop.f32.mrb[0].mxu0
    %v1687 = vadd.f32 0.0, %v1686
    %v1688 = vpop.f32.mrb[0].mxu0
    %v1689 = vpop.f32.mrb[0].mxu0
    %v1690 = vpop.f32.mrb[0].mxu0
    %1691 = vdwg.mxu0
    %1692 = vmatprep.subr.bf16.mxu0 0
    %1693 = vmatpush1.bf16.msra.mxu0 %v1631
    %1694 = vmatprep.subr.bf16.mxu0 0
    %1695 = vmatpush1.bf16.msra.mxu0 %v1632
    %1696 = vmatprep.subr.bf16.mxu0 0
    %1697 = vmatpush1.bf16.msra.mxu0 %v1633
    %1698 = vmatprep.subr.bf16.mxu0 0
    %1699 = vmatpush1.bf16.msra.mxu0 %v1634
    %1700 = vmatprep.subr.bf16.mxu0 0
    %1701 = vmatpush1.bf16.msra.mxu0 %v1635
    %1702 = vmatprep.subr.bf16.mxu0 0
    %1703 = vmatpush1.bf16.msra.mxu0 %v1636
    %1704 = vmatprep.subr.bf16.mxu0 0
    %1705 = vmatpush1.bf16.msra.mxu0 %v1637
    %1706 = vmatprep.subr.bf16.mxu0 0
    %1707 = vmatpush1.bf16.msra.mxu0 %v1638
    %1708 = vmatprep.subr.bf16.mxu0 0
    %1709 = vmatpush1.bf16.msra.mxu0 %v1639
    %1710 = vmatprep.subr.bf16.mxu0 0
    %1711 = vmatpush1.bf16.msra.mxu0 %v1640
    %1712 = vmatprep.subr.bf16.mxu0 0
    %1713 = vmatpush1.bf16.msra.mxu0 %v1641
    %1714 = vmatprep.subr.bf16.mxu0 0
    %1715 = vmatpush1.bf16.msra.mxu0 %v1642
    %1716 = vmatprep.subr.bf16.mxu0 0
    %1717 = vmatpush1.bf16.msra.mxu0 %v1643
    %1718 = vmatprep.subr.bf16.mxu0 0
    %1719 = vmatpush1.bf16.msra.mxu0 %v1644
    %1720 = vmatprep.subr.bf16.mxu0 0
    %1721 = vmatpush1.bf16.msra.mxu0 %v1645
    %1722 = vmatprep.subr.bf16.mxu0 0
    %1723 = vmatpush1.bf16.msra.mxu0 %v1646
    %1724 = vmatprep.mubr.bf16.mxu0 %v1651
    %1725 = vmatmul.mubr.bf16.gmra.mrb[0].mxu0 %v1650
    %v1726 = vpop.f32.mrb[0].mxu0
    %v1727 = vadd.f32 %v1687, %v1726
    %v1728 = vpop.f32.mrb[0].mxu0
    %v1729 = vpop.f32.mrb[0].mxu0
    %v1730 = vpop.f32.mrb[0].mxu0
    %1731 = vdwg.mxu0
    %v1732 = vrot.slane %v1727, 4
    %v1733 = vadd.f32 %v1727, %v1732
    %v1734 = vrot.slane %v1733, 2
    %v1735 = vadd.f32 %v1733, %v1734
    %v1736 = vrot.slane %v1735, 1
    %v1737 = vadd.f32 %v1735, %v1736
    %v1738 = vmul.f32 %v1737, %v439
    %v1739 = vmul.f32 %v1727, %v1727
    %v1740 = vrot.slane %v1739, 4
    %v1741 = vadd.f32 %v1739, %v1740
    %v1742 = vrot.slane %v1741, 2
    %v1743 = vadd.f32 %v1741, %v1742
    %v1744 = vrot.slane %v1743, 1
    %v1745 = vadd.f32 %v1743, %v1744
    %v1746 = vmul.f32 %v1745, %v439
    %v1747 = vmul.f32 %v1738, %v1738
    %v1748 = vsub.f32 %v1746, %v1747
    %v1749 = vmax.f32 %v1748, 0.0
    %v1750 = vld [vmem:[%s6] sm:$0x1]
    %v1751 = vld [vmem:[%s6 + $0x1] sm:$0x1]
    %v1752 = vadd.f32 %v1749, 1e-05
    %v1753 = vrsqrt.pop %v1752
    %v1754 = vmul.f32 %v1750, %v1753
    %v1755 = vlaneseq
    %v1756 = vshrl.u32 %v1755, 7
    %v1757 = vsub.s32 0, %v1756
    %v1758 = vrot.slane %v1754, %v1757
    %v1759 = vmul.f32 %v1727, %v1758
    %v1760 = vmul.f32 %v1738, %v1754
    %v1761 = vsub.f32 %v1751, %v1760
    %v1762 = vlaneseq
    %v1763 = vshrl.u32 %v1762, 7
    %v1764 = vsub.s32 0, %v1763
    %v1765 = vrot.slane %v1761, %v1764
    %v1766 = vadd.f32 %v1759, %v1765
    %vm1767 = vcmp.ge.f32.partialorder %v1766, 0.0
    %v1768 = vstv %s1647
    %v1769 = vmul.f32 %v1768, %v1766
    %v1770 = vsel %vm1767, %v1766, %v1769
    %1771 = vst [vmem:[#allocation13] sm:$0xff] %v1770
    // Predicated region
    $region46: #{tpu_custom_call.1} parent=1 // pred_check
      _
    $region47: #{tpu_custom_call.1} parent=1 // pred_check_branch
      %1773 = sbr.rel (0) target = $region49
    $region48: #{tpu_custom_call.1} parent=1 // pred_region
      %s1775 = ssub.s32 128, 128
      %1776 = vsyncadd [#allocation7], %s1775
      %s1778 = sshll.u32 [#allocation13], 4
      %s1779 = int_to_ptr.vmem [resolvable:$true] %s1778
      %1781 = dma.vmem_to_hbm [thread:$0]  %s1779, 128, %s8, [#allocation7]
    $region49: #{tpu_custom_call.1} parent=1 // pred_fallthru
      _
    // Predicated region
    $region50: #{tpu_custom_call.1} parent=1 // pred_check
      _
    $region51: #{tpu_custom_call.1} parent=1 // pred_check_branch
      %1783 = sbr.rel (0) target = $region53
    $region52: #{tpu_custom_call.1} parent=1 // pred_region
      %1784 = dma.done [#allocation7], 128
    $region53: #{tpu_custom_call.1} parent=1 // pred_fallthru
      _
    %1785 = vsyncpa [#allocation6], 1
    %1786 = vsyncpa [#allocation10], 1
    %1787 = vsyncpa [#allocation7], 1
    %1788 = vsyncpa [#allocation8], 1
  %1789 = vsyncmov [#allocation4]
  %s1790 = vpop.sfrf %1789
  %p1791 = scmp.eq.s32.totalorder %s1790, 0
  %p1792 = pneg %p1791
  %1794 = shalt.err (%p1792)
  %s1795 = scalar_lea.sflag [#allocation4], 1
  %1796 = vsyncmov %s1795
  %s1797 = vpop.sfrf %1796
  %p1798 = scmp.eq.s32.totalorder %s1797, 0
  %p1799 = pneg %p1798
  %1801 = shalt.err (%p1799)

</llo_original>
